<compile_context>
chip_gen: v6e
topology: v6e:2x2x1
jax: 0.10.0
libtpu: 0.0.40
codegen_flags: <defaults>
</compile_context>

<pallas_src>
import functools

import jax
import jax.numpy as jnp
from jax.experimental import pallas as pl
from jax.experimental.pallas import tpu as pltpu

_LANE = 128


def _round_up(x, m):
    return -(-x // m) * m


@functools.lru_cache(maxsize=None)
def _vmem_budgets():
    """(tile working-set budget, scoped vmem limit) in bytes, per TPU generation."""
    cap = None
    try:
        cap = getattr(pltpu.get_tpu_info(), "vmem_capacity_bytes", None)
    except Exception:
        cap = None
    if cap is None:
        cap = 64 * 1024 * 1024                      # unknown -> assume v7x-like 64 MiB/TC
    if cap >= 96 * 1024 * 1024:                     # v5e / v6e: 128 MiB physical
        return 90 * 1024 * 1024, 112 * 1024 * 1024
    return 36 * 1024 * 1024, 48 * 1024 * 1024       # v7x: 64 MiB per TensorCore


def _vmem_tile_bytes(shape, itemsize):
    """Approximate VMEM footprint of a tile, accounting for (sublane, lane) padding."""
    sublane = 8 * max(1, 4 // itemsize)
    lead = 1
    for d in shape[:-2]:
        lead *= int(d)
    return lead * _round_up(int(shape[-2]), sublane) * _round_up(int(shape[-1]), _LANE) * itemsize


def _select_th_out(ho, wo_pad, kc, tco, k, stride, in_item, out_item, budget):
    """Largest per-step output-row count (multiple of 8) whose working set fits VMEM."""
    ho_cap = max(8, _round_up(ho, 8))
    best = 8
    th = 8
    while th <= ho_cap:
        q_len = th + (k - 1) // stride
        mm = th * wo_pad
        total = (
            2 * _vmem_tile_bytes((stride, q_len * wo_pad, kc), in_item)  # band (double buffered)
            + 2 * _vmem_tile_bytes((mm, tco), out_item)                  # output tile (double buffered)
            + _vmem_tile_bytes((mm, tco), 4)                             # f32 accumulator scratch
            + 2 * _vmem_tile_bytes((k, kc, tco), in_item)                # weight tile
            + 4 * _vmem_tile_bytes((1, tco), 4)                          # BN scale + bias
        )
        if total > budget:
            break
        best = th
        th += 8
    return min(best, ho_cap)


# ----------------------------- Pallas kernel ------------------------------- #
def _conv_bn_relu_kernel(x_ref, w_ref, scale_ref, bias_ref, o_ref, acc_ref, *,
                         k, stride, th_out, wo_pad):
    """One (C_out tile, image, row band) grid step.

    x_ref:     (stride, q_len*wo_pad, k*C_in)  phase-split, width-unfolded input band
    w_ref:     (k, k*C_in, TCO)                conv weight (kh major; kw folded into lanes)
    scale_ref: (1, TCO) f32                    BatchNorm scale  (gamma / sqrt(var+eps))
    bias_ref:  (1, TCO) f32                    BatchNorm bias   (beta - mean*scale)
    o_ref:     (th_out*wo_pad, TCO)            output tile
    acc_ref:   (th_out*wo_pad, TCO) f32        accumulator scratch
    """
    mm = th_out * wo_pad
    for kh in range(k):                       # k MXU matmuls, contraction = k*C_in
        start = (kh // stride) * wo_pad       # static, sublane-tile aligned -> no relayout
        lhs = x_ref[kh % stride, start:start + mm, :]
        part = jnp.dot(lhs, w_ref[kh], preferred_element_type=jnp.float32)
        if kh == 0:
            acc_ref[...] = part
        else:
            acc_ref[...] += part
    y = acc_ref[...] * scale_ref[...] + bias_ref[...]      # BatchNorm (eval), f32 epilogue
    o_ref[...] = jnp.maximum(y, 0.0).astype(o_ref.dtype)   # ReLU


# ------------------------------- wrapper ------------------------------------ #
@functools.partial(jax.jit, static_argnames=("kernel_size", "stride", "padding",
                                              "compute_dtype", "out_dtype", "nchw_output"))
def conv_norm_act(x_nchw, weight, gamma, beta, running_mean, running_var, *,
                  kernel_size, stride, padding, eps=1e-5,
                  compute_dtype=None, out_dtype=None, nchw_output=True):
    """ConvNormAct forward: Conv2d(bias=False) -> BatchNorm2d(eval) -> ReLU.

    x_nchw: (N, C_in, H, W) -> (N, C_out, Ho, Wo)  (NHWC slab if nchw_output=False).
    compute_dtype=jnp.bfloat16 halves streamed operand bytes on every generation
    (v5e included); accumulation and the BN/ReLU epilogue always stay f32.
    """
    c_out, c_in, kh_, kw_ = weight.shape
    assert kh_ == kw_ == kernel_size
    n, _, h, w = x_nchw.shape
    k, s, p = kernel_size, stride, padding
    cdt = jnp.dtype(compute_dtype) if compute_dtype is not None else jnp.dtype(x_nchw.dtype)
    out_dt = jnp.dtype(out_dtype) if out_dtype is not None else jnp.dtype(x_nchw.dtype)

    ho = (h + 2 * p - k) // s + 1
    wo = (w + 2 * p - k) // s + 1
    kc = k * c_in                                     # lane-dense MXU contraction

    # Lane-dense output channels, but don't inflate small C_out (flops + store bytes).
    c_out_pad = _round_up(c_out, _LANE) if c_out >= _LANE else c_out
    # Optional C_out tiling (extra parallel grid axis) for deep layers.
    if c_out_pad >= 512 and c_out_pad % 256 == 0:
        tco = 256
    elif c_out_pad >= 512:
        tco = _LANE
    else:
        tco = c_out_pad
    n_co = c_out_pad // tco

    # Sublane-tile-aligned Wo so in-kernel row slices/stores never relayout.
    wo_align = 8 * max(1, 4 // cdt.itemsize)
    wo_pad = _round_up(wo, wo_align)

    budget, vmem_limit = _vmem_budgets()
    th_out = _select_th_out(ho, wo_pad, kc, tco, k, s, cdt.itemsize, out_dt.itemsize, budget)
    hb = -(-ho // th_out)
    ho_pad = hb * th_out
    q_len = th_out + (k - 1) // s
    mm = th_out * wo_pad

    # ---- BatchNorm folding (applied in the f32 epilogue, not baked into the weights) ----
    scale = gamma.astype(jnp.float32) * jax.lax.rsqrt(running_var.astype(jnp.float32) + eps)
    bias = beta.astype(jnp.float32) - running_mean.astype(jnp.float32) * scale
    scale_p = jnp.pad(scale, (0, c_out_pad - c_out)).reshape(1, c_out_pad)
    bias_p = jnp.pad(bias, (0, c_out_pad - c_out)).reshape(1, c_out_pad)

    # ---- weight layout: (kh, kw*C_in, C_out_pad); kw folded into the lane axis ----
    w_t = jnp.transpose(weight, (2, 3, 1, 0)).reshape(k, kc, c_out)
    w_t = jnp.pad(w_t, ((0, 0), (0, 0), (0, c_out_pad - c_out))).astype(cdt)

    # ---- single prep pass: NHWC + pad + width-unfold + phase-split + row-banding ----
    # band[n, b, ph, q*wo_pad + ow, kw*C_in + c] = xp[n, b*th_out*s + ph + q*s, ow*s + kw, c]
    # so the kernel only needs a static leading-dim slice per kh and one lane-dense matmul.
    x_nhwc = jnp.transpose(x_nchw, (0, 2, 3, 1)).astype(cdt)
    h_need = (hb - 1) * th_out * s + (s - 1) + (q_len - 1) * s + 1
    w_need = (wo_pad - 1) * s + k
    xp = jnp.pad(x_nhwc, ((0, 0),
                          (p, max(0, h_need - h - p)),
                          (p, max(0, w_need - w - p)),
                          (0, 0)))
    bands = []
    for b in range(hb):
        r0 = b * th_out * s
        phases = []
        for ph in range(s):
            taps = [xp[:, r0 + ph: r0 + ph + (q_len - 1) * s + 1: s,
                        kw: kw + (wo_pad - 1) * s + 1: s, :]
                    for kw in range(k)]
            phases.append(jnp.stack(taps, axis=-2))      # (N, q_len, wo_pad, k, C_in)
        bands.append(jnp.stack(phases, axis=1))           # (N, s, q_len, wo_pad, k, C_in)
    band = jnp.stack(bands, axis=1)                        # (N, HB, s, q_len, wo_pad, k, C_in)
    band = band.reshape(n, hb, s, q_len * wo_pad, kc)

    kernel = functools.partial(_conv_bn_relu_kernel, k=k, stride=s,
                               th_out=th_out, wo_pad=wo_pad)

    cost = pl.CostEstimate(
        flops=2 * n * hb * mm * k * kc * c_out_pad,
        transcendentals=0,
        bytes_accessed=(n_co * band.size * band.dtype.itemsize
                        + n_co * w_t.size * w_t.dtype.itemsize
                        + 2 * c_out_pad * 4
                        + n * hb * mm * c_out_pad * out_dt.itemsize),
    )

    out = pl.pallas_call(
        kernel,
        out_shape=jax.ShapeDtypeStruct((n, hb, mm, c_out_pad), out_dt),
        grid_spec=pltpu.PrefetchScalarGridSpec(
            num_scalar_prefetch=0,
            # C_out tile is the slowest axis: weight tile stays resident across a
            # whole (N, band) sweep; input band streams once per C_out tile.
            grid=(n_co, n, hb),
            in_specs=[
                pl.BlockSpec((None, None, s, q_len * wo_pad, kc),
                             lambda co, i, j: (i, j, 0, 0, 0)),
                pl.BlockSpec((k, kc, tco), lambda co, i, j: (0, 0, co)),
                pl.BlockSpec((1, tco), lambda co, i, j: (0, co)),
                pl.BlockSpec((1, tco), lambda co, i, j: (0, co)),
            ],
            out_specs=pl.BlockSpec((None, None, mm, tco), lambda co, i, j: (i, j, 0, co)),
            scratch_shapes=[pltpu.VMEM((mm, tco), jnp.float32)],
        ),
        compiler_params=pltpu.CompilerParams(
            dimension_semantics=("parallel", "parallel", "parallel"),
            vmem_limit_bytes=vmem_limit),
        cost_estimate=cost,
    )(band, w_t, scale_p, bias_p)

    out = out.reshape(n, ho_pad, wo_pad, c_out_pad)[:, :ho, :wo, :c_out]
    if nchw_output:   # PyTorch NCHW parity; pass nchw_output=False to skip this HBM pass
        out = jnp.transpose(out, (0, 3, 1, 2))
    return out


# --------------------------------- demo ------------------------------------ #
if __name__ == "__main__":
    # ConvNormAct(in_channels=4, out_channels=8, kernel_size=3, stride, padding=1,
    #             norm=BatchNorm2d(8) in eval mode, act=ReLU)
    N, C_IN, H, W = 2, 4, 16, 16
    C_OUT, K = 8, 3

    key = jax.random.PRNGKey(0)
    kx, kw_, kg, kb, km, kv = jax.random.split(key, 6)

    x = jax.random.normal(kx, (N, C_IN, H, W), dtype=jnp.float32)
    weight = jax.random.normal(kw_, (C_OUT, C_IN, K, K), dtype=jnp.float32) * 0.1
    gamma = 1.0 + 0.1 * jax.random.normal(kg, (C_OUT,), dtype=jnp.float32)
    beta = 0.1 * jax.random.normal(kb, (C_OUT,), dtype=jnp.float32)
    running_mean = 0.1 * jax.random.normal(km, (C_OUT,), dtype=jnp.float32)
    running_var = jnp.abs(1.0 + 0.1 * jax.random.normal(kv, (C_OUT,), dtype=jnp.float32))

    def reference(stride, pad):
        conv = jax.lax.conv_general_dilated(
            x, weight, window_strides=(stride, stride),
            padding=((pad, pad), (pad, pad)),
            dimension_numbers=("NCHW", "OIHW", "NCHW"))
        sc = gamma / jnp.sqrt(running_var + 1e-5)
        bi = beta - running_mean * sc
        return jnp.maximum(conv * sc[None, :, None, None] + bi[None, :, None, None], 0.0)

    # f32 path (tight check), stride=1.
    out = conv_norm_act(x, weight, gamma, beta, running_mean, running_var,
                        kernel_size=K, stride=1, padding=1)
    out = jax.block_until_ready(out)
    ref = reference(1, 1)
    assert out.shape == (N, C_OUT, H, W), out.shape
    assert jnp.allclose(out, ref, atol=1e-4, rtol=1e-4), float(jnp.abs(out - ref).max())

    # bf16 operand streaming (recommended on v5e/v6e/v7x): bf16 streams, f32 accumulate.
    out_bf16 = conv_norm_act(x, weight, gamma, beta, running_mean, running_var,
                             kernel_size=K, stride=1, padding=1,
                             compute_dtype=jnp.bfloat16)
    out_bf16 = jax.block_until_ready(out_bf16)
    assert jnp.allclose(out_bf16, ref, atol=5e-2, rtol=5e-2), float(jnp.abs(out_bf16 - ref).max())

    # stride=2 exercises the phase-split band path (unit-stride in-kernel slices).
    out_s2 = conv_norm_act(x, weight, gamma, beta, running_mean, running_var,
                           kernel_size=K, stride=2, padding=1)
    out_s2 = jax.block_until_ready(out_s2)
    ref_s2 = reference(2, 1)
    assert out_s2.shape == ref_s2.shape, (out_s2.shape, ref_s2.shape)
    assert jnp.allclose(out_s2, ref_s2, atol=1e-4, rtol=1e-4), float(jnp.abs(out_s2 - ref_s2).max())

    print("KERNEL_OK")
</pallas_src>

<mosaic_0001>
module attributes {stable_mosaic.version = 11 : i64} {
  func.func @_conv_bn_relu_kernel(%arg0: i32, %arg1: i32, %arg2: i32, %arg3: memref<1x1x1x288x12xf32, #tpu.memory_space<vmem>>, %arg4: memref<3x12x8xf32, #tpu.memory_space<vmem>>, %arg5: memref<1x8xf32, #tpu.memory_space<vmem>>, %arg6: memref<1x8xf32, #tpu.memory_space<vmem>>, %arg7: memref<1x1x256x8xf32, #tpu.memory_space<vmem>>, %arg8: memref<256x8xf32, #tpu.memory_space<vmem>>) attributes {dimension_semantics = [#tpu.dimension_semantics<parallel>, #tpu.dimension_semantics<parallel>, #tpu.dimension_semantics<parallel>], iteration_bounds = array<i64: 1, 2, 1>, scalar_prefetch = 0 : i64, scratch_operands = 1 : i64, tpu.core_type = #tpu.core_type<tc>, window_params = [{transform_indices = @transform_0, window_bounds = array<i64: 1, 1, 1, 288, 12>}, {transform_indices = @transform_1, window_bounds = array<i64: 3, 12, 8>}, {transform_indices = @transform_2, window_bounds = array<i64: 1, 8>}, {transform_indices = @transform_3, window_bounds = array<i64: 1, 8>}, {transform_indices = @transform_4, window_bounds = array<i64: 1, 1, 256, 8>}]} {
    %c0 = arith.constant 0 : index
    %c0_0 = arith.constant 0 : index
    %c0_1 = arith.constant 0 : index
    %c0_2 = arith.constant 0 : index
    %c0_3 = arith.constant 0 : index
    %0 = vector.load %arg3[%c0, %c0_0, %c0_1, %c0_2, %c0_3] : memref<1x1x1x288x12xf32, #tpu.memory_space<vmem>>, vector<1x1x1x256x12xf32>
    %1 = vector.shape_cast %0 : vector<1x1x1x256x12xf32> to vector<256x12xf32>
    %c0_4 = arith.constant 0 : index
    %c0_5 = arith.constant 0 : index
    %c0_6 = arith.constant 0 : index
    %2 = vector.load %arg4[%c0_4, %c0_5, %c0_6] : memref<3x12x8xf32, #tpu.memory_space<vmem>>, vector<1x12x8xf32>
    %3 = vector.shape_cast %2 : vector<1x12x8xf32> to vector<12x8xf32>
    %cst = arith.constant dense<0.000000e+00> : vector<256x8xf32>
    %4 = tpu.matmul %1, %3, %cst {dimension_numbers = #tpu.dot_dimension_numbers<[1], [0], [0], [1], [0, 0, 1, 1], [], []>} : vector<256x12xf32>, vector<12x8xf32>, vector<256x8xf32> -> vector<256x8xf32>
    %c0_7 = arith.constant 0 : index
    %c0_8 = arith.constant 0 : index
    %5 = vector.load %arg8[%c0_7, %c0_8] : memref<256x8xf32, #tpu.memory_space<vmem>>, vector<256x8xf32>
    tpu.vector_store %arg8[%c0_7, %c0_8], %4 {strides = array<i32>} : memref<256x8xf32, #tpu.memory_space<vmem>>, vector<256x8xf32>,
    %c0_9 = arith.constant 0 : index
    %c0_10 = arith.constant 0 : index
    %c0_11 = arith.constant 0 : index
    %c16 = arith.constant 16 : index
    %c0_12 = arith.constant 0 : index
    %6 = vector.load %arg3[%c0_9, %c0_10, %c0_11, %c16, %c0_12] : memref<1x1x1x288x12xf32, #tpu.memory_space<vmem>>, vector<1x1x1x256x12xf32>
    %7 = vector.shape_cast %6 : vector<1x1x1x256x12xf32> to vector<256x12xf32>
    %c1 = arith.constant 1 : index
    %c0_13 = arith.constant 0 : index
    %c0_14 = arith.constant 0 : index
    %8 = vector.load %arg4[%c1, %c0_13, %c0_14] : memref<3x12x8xf32, #tpu.memory_space<vmem>>, vector<1x12x8xf32>
    %9 = vector.shape_cast %8 : vector<1x12x8xf32> to vector<12x8xf32>
    %cst_15 = arith.constant dense<0.000000e+00> : vector<256x8xf32>
    %10 = tpu.matmul %7, %9, %cst_15 {dimension_numbers = #tpu.dot_dimension_numbers<[1], [0], [0], [1], [0, 0, 1, 1], [], []>} : vector<256x12xf32>, vector<12x8xf32>, vector<256x8xf32> -> vector<256x8xf32>
    %c0_16 = arith.constant 0 : index
    %c0_17 = arith.constant 0 : index
    %11 = vector.load %arg8[%c0_16, %c0_17] : memref<256x8xf32, #tpu.memory_space<vmem>>, vector<256x8xf32>
    %12 = arith.addf %11, %10 : vector<256x8xf32>
    %c0_18 = arith.constant 0 : index
    %c0_19 = arith.constant 0 : index
    %13 = vector.load %arg8[%c0_18, %c0_19] : memref<256x8xf32, #tpu.memory_space<vmem>>, vector<256x8xf32>
    tpu.vector_store %arg8[%c0_18, %c0_19], %12 {strides = array<i32>} : memref<256x8xf32, #tpu.memory_space<vmem>>, vector<256x8xf32>,
    %c0_20 = arith.constant 0 : index
    %c0_21 = arith.constant 0 : index
    %c0_22 = arith.constant 0 : index
    %c32 = arith.constant 32 : index
    %c0_23 = arith.constant 0 : index
    %14 = vector.load %arg3[%c0_20, %c0_21, %c0_22, %c32, %c0_23] : memref<1x1x1x288x12xf32, #tpu.memory_space<vmem>>, vector<1x1x1x256x12xf32>
    %15 = vector.shape_cast %14 : vector<1x1x1x256x12xf32> to vector<256x12xf32>
    %c2 = arith.constant 2 : index
    %c0_24 = arith.constant 0 : index
    %c0_25 = arith.constant 0 : index
    %16 = vector.load %arg4[%c2, %c0_24, %c0_25] : memref<3x12x8xf32, #tpu.memory_space<vmem>>, vector<1x12x8xf32>
    %17 = vector.shape_cast %16 : vector<1x12x8xf32> to vector<12x8xf32>
    %cst_26 = arith.constant dense<0.000000e+00> : vector<256x8xf32>
    %18 = tpu.matmul %15, %17, %cst_26 {dimension_numbers = #tpu.dot_dimension_numbers<[1], [0], [0], [1], [0, 0, 1, 1], [], []>} : vector<256x12xf32>, vector<12x8xf32>, vector<256x8xf32> -> vector<256x8xf32>
    %c0_27 = arith.constant 0 : index
    %c0_28 = arith.constant 0 : index
    %19 = vector.load %arg8[%c0_27, %c0_28] : memref<256x8xf32, #tpu.memory_space<vmem>>, vector<256x8xf32>
    %20 = arith.addf %19, %18 : vector<256x8xf32>
    %c0_29 = arith.constant 0 : index
    %c0_30 = arith.constant 0 : index
    %21 = vector.load %arg8[%c0_29, %c0_30] : memref<256x8xf32, #tpu.memory_space<vmem>>, vector<256x8xf32>
    tpu.vector_store %arg8[%c0_29, %c0_30], %20 {strides = array<i32>} : memref<256x8xf32, #tpu.memory_space<vmem>>, vector<256x8xf32>,
    %c0_31 = arith.constant 0 : index
    %c0_32 = arith.constant 0 : index
    %22 = vector.load %arg8[%c0_31, %c0_32] : memref<256x8xf32, #tpu.memory_space<vmem>>, vector<256x8xf32>
    %c0_33 = arith.constant 0 : index
    %c0_34 = arith.constant 0 : index
    %23 = vector.load %arg5[%c0_33, %c0_34] : memref<1x8xf32, #tpu.memory_space<vmem>>, vector<1x8xf32>
    %24 = vector.broadcast %23 : vector<1x8xf32> to vector<256x8xf32>
    %25 = arith.mulf %22, %24 : vector<256x8xf32>
    %c0_35 = arith.constant 0 : index
    %c0_36 = arith.constant 0 : index
    %26 = vector.load %arg6[%c0_35, %c0_36] : memref<1x8xf32, #tpu.memory_space<vmem>>, vector<1x8xf32>
    %27 = vector.broadcast %26 : vector<1x8xf32> to vector<256x8xf32>
    %28 = arith.addf %25, %27 : vector<256x8xf32>
    %cst_37 = arith.constant 0.000000e+00 : f32
    %29 = vector.broadcast %cst_37 : f32 to vector<256x8xf32>
    %30 = arith.maximumf %28, %29 : vector<256x8xf32>
    %c0_38 = arith.constant 0 : index
    %c0_39 = arith.constant 0 : index
    %c0_40 = arith.constant 0 : index
    %c0_41 = arith.constant 0 : index
    %31 = vector.load %arg7[%c0_38, %c0_39, %c0_40, %c0_41] : memref<1x1x256x8xf32, #tpu.memory_space<vmem>>, vector<1x1x256x8xf32>
    %32 = vector.shape_cast %31 : vector<1x1x256x8xf32> to vector<256x8xf32>
    %33 = vector.shape_cast %30 : vector<256x8xf32> to vector<1x1x256x8xf32>
    tpu.vector_store %arg7[%c0_38, %c0_39, %c0_40, %c0_41], %33 {strides = array<i32>} : memref<1x1x256x8xf32, #tpu.memory_space<vmem>>, vector<1x1x256x8xf32>,
    return
  }
  func.func @transform_0(%arg0: i32, %arg1: i32, %arg2: i32) -> (i32, i32, i32, i32, i32) {
    %c0_i32 = arith.constant 0 : i32
    %c0_i32_0 = arith.constant 0 : i32
    %c0_i32_1 = arith.constant 0 : i32
    %c0_i32_2 = arith.constant 0 : i32
    return %arg1, %arg2, %c0_i32, %c0_i32_0, %c0_i32_1 : i32, i32, i32, i32, i32
  }
  func.func @transform_1(%arg0: i32, %arg1: i32, %arg2: i32) -> (i32, i32, i32) {
    %c0_i32 = arith.constant 0 : i32
    %c0_i32_0 = arith.constant 0 : i32
    %c0_i32_1 = arith.constant 0 : i32
    return %c0_i32, %c0_i32_0, %arg0 : i32, i32, i32
  }
  func.func @transform_2(%arg0: i32, %arg1: i32, %arg2: i32) -> (i32, i32) {
    %c0_i32 = arith.constant 0 : i32
    %c0_i32_0 = arith.constant 0 : i32
    return %c0_i32, %arg0 : i32, i32
  }
  func.func @transform_3(%arg0: i32, %arg1: i32, %arg2: i32) -> (i32, i32) {
    %c0_i32 = arith.constant 0 : i32
    %c0_i32_0 = arith.constant 0 : i32
    return %c0_i32, %arg0 : i32, i32
  }
  func.func @transform_4(%arg0: i32, %arg1: i32, %arg2: i32) -> (i32, i32, i32, i32) {
    %c0_i32 = arith.constant 0 : i32
    %c0_i32_0 = arith.constant 0 : i32
    return %arg1, %arg2, %c0_i32, %arg0 : i32, i32, i32, i32
  }
}

</mosaic_0001>

<llo_original>
// kernel: conv_norm_act.1
$region0: #{conv_norm_act.1}
  #allocation0 [shape = 'u32[]', space=smem, size = 0x4, offset = 0x4, fixed_abs, tag = 'smem constant byte address 0x4 - core index']
  #allocation1 [shape = 'u32[144,128]{1,0:T(1,128)}', space=vmem, size = 0x12000, scoped, tag = 'internal scratch']
  #allocation2 [shape = 'f32[256,8]{1,0:T(8,128)}', space=vmem, size = 0x20000, scoped, tag = 'scratch operand']
  %s0 = inlined_call_operand.vmem [shape: f32[2,1,1,288,12], index: 0, kind: input, shape index: {}]
  %s1 = inlined_call_operand.vmem [shape: f32[3,12,8], index: 1, kind: input, shape index: {}]
  %s2 = inlined_call_operand.vmem [shape: f32[1,8], index: 2, kind: input, shape index: {}]
  %s3 = inlined_call_operand.vmem [shape: f32[1,8], index: 3, kind: input, shape index: {}]
  %s4 = inlined_call_operand.vmem [shape: f32[2,1,256,8], index: 4, kind: output, shape index: {}]
  %s5 = sld [smem:[#allocation0]]
  $region49: #{conv_norm_act.1} parent=0
    _
  %s7 = ssub.s32 1, %s5
  %s8 = scalar_select 0, %s7, %s5
  loop: start=0, step=1, limit=4
  $region2: #{conv_norm_act.1} parent=0 // loop_pre_header
    _
  $region3: #{conv_norm_act.1} parent=0 // loop_header
    %s10 = sphi 0, %s14
    %p11 = scmp.ge.s32.totalorder %s10, 4
    %s17 = sphi 0, %s36
    %s18 = sphi 0, %s32
    %s19 = sphi 0, %s28
    %s20 = sphi 0, %s17
    %s21 = sphi 0, %s18
    %s22 = sphi 0, %s19
    %s23 = sphi 0, %s20
    %s24 = sphi 0, %s21
    %s25 = sphi 0, %s22
    %s41 = sphi 0, %s43
    %s44 = sphi 0, %s41
    %s45 = sphi 0, %s44
    %s61 = sphi 0, %s45
    %s67 = sphi 0, %s69
    %s70 = sphi 0, %s67
    %s71 = sphi 0, %s70
    %s87 = sphi 0, %s71
    %s93 = sphi 0, %s95
    %s96 = sphi 0, %s93
    %s97 = sphi 0, %s96
    %s113 = sphi 0, %s97
    %s119 = sphi 0, %s121
    %s122 = sphi 0, %s119
    %s123 = sphi 0, %s122
    %s139 = sphi 0, %s123
    %s149 = sphi 0, %s151
    %s152 = sphi 0, %s149
    %s153 = sphi 0, %s152
    %s169 = sphi 0, %s153
  $region4: #{conv_norm_act.1} parent=0 // loop_header_branch
    %13 = sbr.rel (%p11) target = $region8
  $region5: #{conv_norm_act.1} parent=0 // loop_body
    %s15 = ssub.s32 %s10, 1
    %s16 = ssub.s32 %s10, 2
    %s26 = sadd.s32 1, %s19
    %p27 = scmp.ge.s32.totalorder %s26, 1
    %s28 = scalar_select %p27, 0, %s26
    %s29 = sadd.s32 1, %s18
    %s30 = scalar_select %p27, %s29, %s18
    %p31 = scmp.ge.s32.totalorder %s30, 2
    %s32 = scalar_select %p31, 0, %s30
    %s33 = sadd.s32 1, %s17
    %s34 = scalar_select %p31, %s33, %s17
    %p35 = scmp.ge.s32.totalorder %s34, 1
    %s36 = scalar_select %p35, 0, %s34
    %s37 = ssub.s32 %s18, %s32
    %s38 = ssub.s32 %s19, %s28
    %s39 = sor.u32 %s37, %s38
    %p40 = scmp.eq.s32.totalorder %s39, 0
    %s42 = sadd.s32 %s41, 1
    %s43 = scalar_select %p40, %s41, %s42
    %p46 = pneg %p40
    %p47 = scmp.eq.s32.totalorder %s10, 1
    %p48 = por %p46, %p47
    %p49 = scmp.ne.s32.totalorder %s41, %s44
    %p50 = scmp.eq.s32.totalorder %s10, 0
    %p51 = por %p49, %p50
    %p52 = scmp.ne.s32.totalorder %s41, %s44
    %p53 = scmp.eq.s32.totalorder %s15, 1
    %p54 = por %p52, %p53
    %p55 = scmp.ne.s32.totalorder %s44, %s45
    %p56 = scmp.eq.s32.totalorder %s15, 0
    %p57 = por %p55, %p56
    %p58 = scmp.ne.s32.totalorder %s44, %s45
    %p59 = scmp.eq.s32.totalorder %s16, 1
    %p60 = por %p58, %p59
    %p62 = scmp.ne.s32.totalorder %s45, %s61
    %p63 = scmp.eq.s32.totalorder %s16, 0
    %p64 = por %p62, %p63
    %s65 = ssub.s32 %s17, %s36
    %p66 = scmp.eq.s32.totalorder %s65, 0
    %s68 = sadd.s32 %s67, 1
    %s69 = scalar_select %p66, %s67, %s68
    %p72 = pneg %p66
    %p73 = scmp.eq.s32.totalorder %s10, 1
    %p74 = por %p72, %p73
    %p75 = scmp.ne.s32.totalorder %s67, %s70
    %p76 = scmp.eq.s32.totalorder %s10, 0
    %p77 = por %p75, %p76
    %p78 = scmp.ne.s32.totalorder %s67, %s70
    %p79 = scmp.eq.s32.totalorder %s15, 1
    %p80 = por %p78, %p79
    %p81 = scmp.ne.s32.totalorder %s70, %s71
    %p82 = scmp.eq.s32.totalorder %s15, 0
    %p83 = por %p81, %p82
    %p84 = scmp.ne.s32.totalorder %s70, %s71
    %p85 = scmp.eq.s32.totalorder %s16, 1
    %p86 = por %p84, %p85
    %p88 = scmp.ne.s32.totalorder %s71, %s87
    %p89 = scmp.eq.s32.totalorder %s16, 0
    %p90 = por %p88, %p89
    %s91 = ssub.s32 %s17, %s36
    %p92 = scmp.eq.s32.totalorder %s91, 0
    %s94 = sadd.s32 %s93, 1
    %s95 = scalar_select %p92, %s93, %s94
    %p98 = pneg %p92
    %p99 = scmp.eq.s32.totalorder %s10, 1
    %p100 = por %p98, %p99
    %p101 = scmp.ne.s32.totalorder %s93, %s96
    %p102 = scmp.eq.s32.totalorder %s10, 0
    %p103 = por %p101, %p102
    %p104 = scmp.ne.s32.totalorder %s93, %s96
    %p105 = scmp.eq.s32.totalorder %s15, 1
    %p106 = por %p104, %p105
    %p107 = scmp.ne.s32.totalorder %s96, %s97
    %p108 = scmp.eq.s32.totalorder %s15, 0
    %p109 = por %p107, %p108
    %p110 = scmp.ne.s32.totalorder %s96, %s97
    %p111 = scmp.eq.s32.totalorder %s16, 1
    %p112 = por %p110, %p111
    %p114 = scmp.ne.s32.totalorder %s97, %s113
    %p115 = scmp.eq.s32.totalorder %s16, 0
    %p116 = por %p114, %p115
    %s117 = ssub.s32 %s17, %s36
    %p118 = scmp.eq.s32.totalorder %s117, 0
    %s120 = sadd.s32 %s119, 1
    %s121 = scalar_select %p118, %s119, %s120
    %p124 = pneg %p118
    %p125 = scmp.eq.s32.totalorder %s10, 1
    %p126 = por %p124, %p125
    %p127 = scmp.ne.s32.totalorder %s119, %s122
    %p128 = scmp.eq.s32.totalorder %s10, 0
    %p129 = por %p127, %p128
    %p130 = scmp.ne.s32.totalorder %s119, %s122
    %p131 = scmp.eq.s32.totalorder %s15, 1
    %p132 = por %p130, %p131
    %p133 = scmp.ne.s32.totalorder %s122, %s123
    %p134 = scmp.eq.s32.totalorder %s15, 0
    %p135 = por %p133, %p134
    %p136 = scmp.ne.s32.totalorder %s122, %s123
    %p137 = scmp.eq.s32.totalorder %s16, 1
    %p138 = por %p136, %p137
    %p140 = scmp.ne.s32.totalorder %s123, %s139
    %p141 = scmp.eq.s32.totalorder %s16, 0
    %p142 = por %p140, %p141
    %s143 = ssub.s32 %s18, %s32
    %s144 = ssub.s32 %s19, %s28
    %s145 = sor.u32 %s143, %s144
    %s146 = ssub.s32 %s17, %s36
    %s147 = sor.u32 %s145, %s146
    %p148 = scmp.eq.s32.totalorder %s147, 0
    %s150 = sadd.s32 %s149, 1
    %s151 = scalar_select %p148, %s149, %s150
    %p154 = pneg %p148
    %p155 = scmp.eq.s32.totalorder %s10, 1
    %p156 = por %p154, %p155
    %p157 = scmp.ne.s32.totalorder %s149, %s152
    %p158 = scmp.eq.s32.totalorder %s10, 0
    %p159 = por %p157, %p158
    %p160 = scmp.ne.s32.totalorder %s149, %s152
    %p161 = scmp.eq.s32.totalorder %s15, 1
    %p162 = por %p160, %p161
    %p163 = scmp.ne.s32.totalorder %s152, %s153
    %p164 = scmp.eq.s32.totalorder %s15, 0
    %p165 = por %p163, %p164
    %p166 = scmp.ne.s32.totalorder %s152, %s153
    %p167 = scmp.eq.s32.totalorder %s16, 1
    %p168 = por %p166, %p167
    %p170 = scmp.ne.s32.totalorder %s153, %s169
    %p171 = scmp.eq.s32.totalorder %s16, 0
    %p172 = por %p170, %p171
    %p173 = scmp.le.s32.totalorder 1, %s10
    %p174 = scmp.lt.s32.totalorder %s10, 3
    %p175 = pnand %p173, %p174
    %p176 = pneg %p175
    // Predicated region
    $region9: #{conv_norm_act.1} parent=5 // pred_check
      _
    $region10: #{conv_norm_act.1} parent=5 // pred_check_branch
      %178 = sbr.rel (%p175) target = $region12
    $region11: #{conv_norm_act.1} parent=5 // pred_region
      %s179 = ssub.s32 %s10, 1
      // Predicated region
      $region13: #{conv_norm_act.1} parent=11 // pred_check
        %p180 = pneg %p83
      $region14: #{conv_norm_act.1} parent=11 // pred_check_branch
        %182 = sbr.rel (%p180) target = $region16
      $region15: #{conv_norm_act.1} parent=11 // pred_region
        %p183 = scmp.lt.s32.totalorder %s20, 0
        %s184 = scalar_select %p183, %s20, 0
        %s185 = smul.addr %s184, 8
        %s186 = scalar_lea.vmem %s1, %s185
      $region16: #{conv_norm_act.1} parent=11 // pred_fallthru
        _
      // Predicated region
      $region17: #{conv_norm_act.1} parent=11 // pred_check
        %p187 = pneg %p109
      $region18: #{conv_norm_act.1} parent=11 // pred_check_branch
        %189 = sbr.rel (%p187) target = $region20
      $region19: #{conv_norm_act.1} parent=11 // pred_region
        %p190 = scmp.lt.s32.totalorder %s20, 0
        %s191 = scalar_select %p190, %s20, 0
        %s192 = scalar_lea.vmem %s2, %s191
      $region20: #{conv_norm_act.1} parent=11 // pred_fallthru
        _
      // Predicated region
      $region21: #{conv_norm_act.1} parent=11 // pred_check
        %p193 = pneg %p135
      $region22: #{conv_norm_act.1} parent=11 // pred_check_branch
        %195 = sbr.rel (%p193) target = $region24
      $region23: #{conv_norm_act.1} parent=11 // pred_region
        %p196 = scmp.lt.s32.totalorder %s20, 0
        %s197 = scalar_select %p196, %s20, 0
        %s198 = scalar_lea.vmem %s3, %s197
      $region24: #{conv_norm_act.1} parent=11 // pred_fallthru
        _
    $region12: #{conv_norm_act.1} parent=5 // pred_fallthru
      _
    %p199 = scmp.lt.s32.totalorder %s10, 2
    // Predicated region
    $region25: #{conv_norm_act.1} parent=5 // pred_check
      %p200 = pneg %p199
    $region26: #{conv_norm_act.1} parent=5 // pred_check_branch
      %202 = sbr.rel (%p200) target = $region28
    $region27: #{conv_norm_act.1} parent=5 // pred_region
      // Predicated region
      $region29: #{conv_norm_act.1} parent=27 // pred_check
        %p203 = pneg %p51
      $region30: #{conv_norm_act.1} parent=27 // pred_check_branch
        %205 = sbr.rel (%p203) target = $region32
      $region31: #{conv_norm_act.1} parent=27 // pred_region
        %p206 = scmp.lt.s32.totalorder %s18, 1
        %s207 = scalar_select %p206, %s18, 1
        %p208 = scmp.lt.s32.totalorder %s19, 0
        %s209 = scalar_select %p208, %s19, 0
        %s210 = smul.addr %s209, 36
        %s211 = smul.addr %s207, 36
        %s212 = sadd.s32 %s210, %s211
        %s213 = smul.addr %s212, 8
        %s214 = scalar_lea.vmem %s0, %s213
      $region32: #{conv_norm_act.1} parent=27 // pred_fallthru
        _
    $region28: #{conv_norm_act.1} parent=5 // pred_fallthru
      _
    %p215 = scmp.le.s32.totalorder 1, %s10
    %p216 = scmp.lt.s32.totalorder %s10, 3
    %p217 = pnand %p215, %p216
    %p218 = pneg %p217
    // Predicated region
    $region33: #{conv_norm_act.1} parent=5 // pred_check
      _
    $region34: #{conv_norm_act.1} parent=5 // pred_check_branch
      %220 = sbr.rel (%p217) target = $region36
    $region35: #{conv_norm_act.1} parent=5 // pred_region
      %s221 = ssub.s32 %s10, 1
      %p222 = scmp.lt.s32.totalorder %s21, 1
      %s223 = scalar_select %p222, %s21, 1
      %p224 = scmp.lt.s32.totalorder %s22, 0
      %s225 = scalar_select %p224, %s22, 0
      %s226 = smul.addr %s225, 36
      %s227 = smul.addr %s223, 36
      %s228 = sadd.s32 %s226, %s227
      %s229 = smul.addr %s228, 8
      %s230 = scalar_lea.vmem %s0, %s229
      %p231 = pneg %p57
      %p232 = pneg %p54
      %p233 = scmp.lt.s32.totalorder %s20, 0
      %s234 = scalar_select %p233, %s20, 0
      %s235 = smul.addr %s234, 8
      %s236 = scalar_lea.vmem %s1, %s235
      %p237 = pneg %p83
      %p238 = pneg %p80
      %p239 = scmp.lt.s32.totalorder %s20, 0
      %s240 = scalar_select %p239, %s20, 0
      %s241 = scalar_lea.vmem %s2, %s240
      %p242 = pneg %p109
      %p243 = pneg %p106
      %p244 = scmp.lt.s32.totalorder %s20, 0
      %s245 = scalar_select %p244, %s20, 0
      %s246 = scalar_lea.vmem %s3, %s245
      %p247 = pneg %p135
      %p248 = pneg %p132
      %p249 = pneg %p165
      %p250 = pneg %p162
      %p251 = scmp.lt.s32.totalorder %s21, 1
      %s252 = scalar_select %p251, %s21, 1
      %p253 = scmp.lt.s32.totalorder %s22, 0
      %s254 = scalar_select %p253, %s22, 0
      %p255 = scmp.lt.s32.totalorder %s20, 0
      %s256 = scalar_select %p255, %s20, 0
      %s257 = smul.addr %s254, 32
      %s258 = sadd.s32 %s256, %s257
      %s259 = smul.addr %s252, 32
      %s260 = sadd.s32 %s258, %s259
      %s261 = smul.addr %s260, 8
      %s262 = scalar_lea.vmem %s4, %s261
      %p263 = scmp.lt.s32.totalorder %s21, 1
      %s264 = scalar_select %p263, %s21, 1
      %p265 = scmp.lt.s32.totalorder %s22, 0
      %s266 = scalar_select %p265, %s22, 0
      %s267 = smul.addr %s266, 36
      %s268 = smul.addr %s264, 36
      %s269 = sadd.s32 %s267, %s268
      %s270 = smul.addr %s269, 8
      %s271 = scalar_lea.vmem %s0, %s270
      %p272 = scmp.lt.s32.totalorder %s20, 0
      %s273 = scalar_select %p272, %s20, 0
      %s274 = smul.addr %s273, 8
      %s275 = scalar_lea.vmem %s1, %s274
      %p276 = scmp.lt.s32.totalorder %s20, 0
      %s277 = scalar_select %p276, %s20, 0
      %s278 = scalar_lea.vmem %s2, %s277
      %p279 = scmp.lt.s32.totalorder %s20, 0
      %s280 = scalar_select %p279, %s20, 0
      %s281 = scalar_lea.vmem %s3, %s280
      %p282 = scmp.lt.s32.totalorder %s21, 1
      %s283 = scalar_select %p282, %s21, 1
      %p284 = scmp.lt.s32.totalorder %s22, 0
      %s285 = scalar_select %p284, %s22, 0
      %p286 = scmp.lt.s32.totalorder %s20, 0
      %s287 = scalar_select %p286, %s20, 0
      %s288 = smul.addr %s285, 32
      %s289 = sadd.s32 %s287, %s288
      %s290 = smul.addr %s283, 32
      %s291 = sadd.s32 %s289, %s290
      %s292 = smul.addr %s291, 8
      %s293 = scalar_lea.vmem %s4, %s292
      %v294 = vld [vmem:[%s271] sm:$0xff]
      %v295 = vld [vmem:[%s271 + $0x8] sm:$0xff]
      %v296 = vld [vmem:[%s271 + $0x10] sm:$0xff]
      %v297 = vld [vmem:[%s271 + $0x18] sm:$0xff]
      %v298 = vld [vmem:[%s271 + $0x20] sm:$0xff]
      %v299 = vld [vmem:[%s271 + $0x28] sm:$0xff]
      %v300 = vld [vmem:[%s271 + $0x30] sm:$0xff]
      %v301 = vld [vmem:[%s271 + $0x38] sm:$0xff]
      %v302 = vld [vmem:[%s271 + $0x40] sm:$0xff]
      %v303 = vld [vmem:[%s271 + $0x48] sm:$0xff]
      %v304 = vld [vmem:[%s271 + $0x50] sm:$0xff]
      %v305 = vld [vmem:[%s271 + $0x58] sm:$0xff]
      %v306 = vld [vmem:[%s271 + $0x60] sm:$0xff]
      %v307 = vld [vmem:[%s271 + $0x68] sm:$0xff]
      %v308 = vld [vmem:[%s271 + $0x70] sm:$0xff]
      %v309 = vld [vmem:[%s271 + $0x78] sm:$0xff]
      %v310 = vld [vmem:[%s271 + $0x80] sm:$0xff]
      %v311 = vld [vmem:[%s271 + $0x88] sm:$0xff]
      %v312 = vld [vmem:[%s271 + $0x90] sm:$0xff]
      %v313 = vld [vmem:[%s271 + $0x98] sm:$0xff]
      %v314 = vld [vmem:[%s271 + $0xa0] sm:$0xff]
      %v315 = vld [vmem:[%s271 + $0xa8] sm:$0xff]
      %v316 = vld [vmem:[%s271 + $0xb0] sm:$0xff]
      %v317 = vld [vmem:[%s271 + $0xb8] sm:$0xff]
      %v318 = vld [vmem:[%s271 + $0xc0] sm:$0xff]
      %v319 = vld [vmem:[%s271 + $0xc8] sm:$0xff]
      %v320 = vld [vmem:[%s271 + $0xd0] sm:$0xff]
      %v321 = vld [vmem:[%s271 + $0xd8] sm:$0xff]
      %v322 = vld [vmem:[%s271 + $0xe0] sm:$0xff]
      %v323 = vld [vmem:[%s271 + $0xe8] sm:$0xff]
      %v324 = vld [vmem:[%s271 + $0xf0] sm:$0xff]
      %v325 = vld [vmem:[%s271 + $0xf8] sm:$0xff]
      %v326 = vld [vmem:[%s275] sm:$0xff]
      %v327 = vld [vmem:[%s275 + $0x8] sm:$0xf]
      %vm328 = vcmask 97280
      %v330 = vsel %vm328, %v294, 0
      %v333 = vsel %vm328, %v295, 0
      %v336 = vsel %vm328, %v296, 0
      %v339 = vsel %vm328, %v297, 0
      %v342 = vsel %vm328, %v298, 0
      %v345 = vsel %vm328, %v299, 0
      %v348 = vsel %vm328, %v300, 0
      %v351 = vsel %vm328, %v301, 0
      %v354 = vsel %vm328, %v302, 0
      %v357 = vsel %vm328, %v303, 0
      %v360 = vsel %vm328, %v304, 0
      %v363 = vsel %vm328, %v305, 0
      %v366 = vsel %vm328, %v306, 0
      %v369 = vsel %vm328, %v307, 0
      %v372 = vsel %vm328, %v308, 0
      %v375 = vsel %vm328, %v309, 0
      %v378 = vsel %vm328, %v310, 0
      %v381 = vsel %vm328, %v311, 0
      %v384 = vsel %vm328, %v312, 0
      %v387 = vsel %vm328, %v313, 0
      %v390 = vsel %vm328, %v314, 0
      %v393 = vsel %vm328, %v315, 0
      %v396 = vsel %vm328, %v316, 0
      %v399 = vsel %vm328, %v317, 0
      %v402 = vsel %vm328, %v318, 0
      %v405 = vsel %vm328, %v319, 0
      %v408 = vsel %vm328, %v320, 0
      %v411 = vsel %vm328, %v321, 0
      %v414 = vsel %vm328, %v322, 0
      %v417 = vsel %vm328, %v323, 0
      %v420 = vsel %vm328, %v324, 0
      %v423 = vsel %vm328, %v325, 0
      %vm425 = vcmask 1043456
      %v427 = vsel %vm425, %v327, 0
      %429 = vmatprep.subr.mxu0 0.0
      %430 = vmatpush1.msra.mxu0 0.0
      %431 = vmatprep.subr.mxu0 0.0
      %432 = vmatpush1.msra.mxu0 0.0
      %433 = vmatprep.subr.mxu0 0.0
      %434 = vmatpush1.msra.mxu0 0.0
      %435 = vmatprep.subr.mxu0 0.0
      %436 = vmatpush1.msra.mxu0 0.0
      %437 = vmatprep.subr.mxu0 0.0
      %438 = vmatpush1.msra.mxu0 0.0
      %439 = vmatprep.subr.mxu0 0.0
      %440 = vmatpush1.msra.mxu0 0.0
      %441 = vmatprep.subr.mxu0 0.0
      %442 = vmatpush1.msra.mxu0 0.0
      %443 = vmatprep.subr.mxu0 0.0
      %444 = vmatpush1.msra.mxu0 0.0
      %445 = vmatprep.subr.mxu0 0.0
      %446 = vmatpush1.msra.mxu0 0.0
      %447 = vmatprep.subr.mxu0 0.0
      %448 = vmatpush1.msra.mxu0 0.0
      %449 = vmatprep.subr.mxu0 0.0
      %450 = vmatpush1.msra.mxu0 0.0
      %451 = vmatprep.subr.mxu0 0.0
      %452 = vmatpush1.msra.mxu0 0.0
      %453 = vmatprep.subr.mxu0 0.0
      %454 = vmatpush1.msra.mxu0 0.0
      %455 = vmatprep.subr.mxu0 0.0
      %456 = vmatpush1.msra.mxu0 0.0
      %457 = vmatprep.subr.mxu0 0.0
      %458 = vmatpush1.msra.mxu0 %v427
      %459 = vmatprep.subr.mxu0 0.0
      %460 = vmatpush1.msra.mxu0 %v326
      %461 = vmatprep.subr.mxu0 0.0
      %462 = vmatpush2.msra.mxu0 0.0
      %463 = vmatprep.subr.mxu0 0.0
      %464 = vmatpush2.msra.mxu0 0.0
      %465 = vmatprep.subr.mxu0 0.0
      %466 = vmatpush2.msra.mxu0 0.0
      %467 = vmatprep.subr.mxu0 0.0
      %468 = vmatpush2.msra.mxu0 0.0
      %469 = vmatprep.subr.mxu0 0.0
      %470 = vmatpush2.msra.mxu0 0.0
      %471 = vmatprep.subr.mxu0 0.0
      %472 = vmatpush2.msra.mxu0 0.0
      %473 = vmatprep.subr.mxu0 0.0
      %474 = vmatpush2.msra.mxu0 0.0
      %475 = vmatprep.subr.mxu0 0.0
      %476 = vmatpush2.msra.mxu0 0.0
      %477 = vmatprep.subr.mxu0 0.0
      %478 = vmatpush2.msra.mxu0 0.0
      %479 = vmatprep.subr.mxu0 0.0
      %480 = vmatpush2.msra.mxu0 0.0
      %481 = vmatprep.subr.mxu0 0.0
      %482 = vmatpush2.msra.mxu0 0.0
      %483 = vmatprep.subr.mxu0 0.0
      %484 = vmatpush2.msra.mxu0 0.0
      %485 = vmatprep.subr.mxu0 0.0
      %486 = vmatpush2.msra.mxu0 0.0
      %487 = vmatprep.subr.mxu0 0.0
      %488 = vmatpush2.msra.mxu0 0.0
      %489 = vmatprep.subr.mxu0 0.0
      %490 = vmatpush2.msra.mxu0 0.0
      %491 = vmatprep.subr.mxu0 0.0
      %492 = vmatpush2.msra.mxu0 0.0
      %493 = vmatprep.mubr.f32.mxu0 0.0
      %494 = vmatmul.mubr.f32.gmra.mxu0 %v330
      %v495 = vpop.f32.mrf.mxu0
      %v496 = vadd.f32 0.0, %v495
      %v497 = vpop.f32.mrf.mxu0
      %498 = vmatprep.mubr.f32.mxu0 0.0
      %499 = vmatmul.mubr.f32.gmra.mxu0 %v333
      %v500 = vpop.f32.mrf.mxu0
      %v501 = vadd.f32 0.0, %v500
      %v502 = vpop.f32.mrf.mxu0
      %503 = vmatprep.mubr.f32.mxu0 0.0
      %504 = vmatmul.mubr.f32.gmra.mxu0 %v336
      %v505 = vpop.f32.mrf.mxu0
      %v506 = vadd.f32 0.0, %v505
      %v507 = vpop.f32.mrf.mxu0
      %508 = vmatprep.mubr.f32.mxu0 0.0
      %509 = vmatmul.mubr.f32.gmra.mxu0 %v339
      %v510 = vpop.f32.mrf.mxu0
      %v511 = vadd.f32 0.0, %v510
      %v512 = vpop.f32.mrf.mxu0
      %513 = vmatprep.mubr.f32.mxu0 0.0
      %514 = vmatmul.mubr.f32.gmra.mxu0 %v342
      %v515 = vpop.f32.mrf.mxu0
      %v516 = vadd.f32 0.0, %v515
      %v517 = vpop.f32.mrf.mxu0
      %518 = vmatprep.mubr.f32.mxu0 0.0
      %519 = vmatmul.mubr.f32.gmra.mxu0 %v345
      %v520 = vpop.f32.mrf.mxu0
      %v521 = vadd.f32 0.0, %v520
      %v522 = vpop.f32.mrf.mxu0
      %523 = vmatprep.mubr.f32.mxu0 0.0
      %524 = vmatmul.mubr.f32.gmra.mxu0 %v348
      %v525 = vpop.f32.mrf.mxu0
      %v526 = vadd.f32 0.0, %v525
      %v527 = vpop.f32.mrf.mxu0
      %528 = vmatprep.mubr.f32.mxu0 0.0
      %529 = vmatmul.mubr.f32.gmra.mxu0 %v351
      %v530 = vpop.f32.mrf.mxu0
      %v531 = vadd.f32 0.0, %v530
      %v532 = vpop.f32.mrf.mxu0
      %533 = vmatprep.mubr.f32.mxu0 0.0
      %534 = vmatmul.mubr.f32.gmra.mxu0 %v354
      %v535 = vpop.f32.mrf.mxu0
      %v536 = vadd.f32 0.0, %v535
      %v537 = vpop.f32.mrf.mxu0
      %538 = vmatprep.mubr.f32.mxu0 0.0
      %539 = vmatmul.mubr.f32.gmra.mxu0 %v357
      %v540 = vpop.f32.mrf.mxu0
      %v541 = vadd.f32 0.0, %v540
      %v542 = vpop.f32.mrf.mxu0
      %543 = vmatprep.mubr.f32.mxu0 0.0
      %544 = vmatmul.mubr.f32.gmra.mxu0 %v360
      %v545 = vpop.f32.mrf.mxu0
      %v546 = vadd.f32 0.0, %v545
      %v547 = vpop.f32.mrf.mxu0
      %548 = vmatprep.mubr.f32.mxu0 0.0
      %549 = vmatmul.mubr.f32.gmra.mxu0 %v363
      %v550 = vpop.f32.mrf.mxu0
      %v551 = vadd.f32 0.0, %v550
      %v552 = vpop.f32.mrf.mxu0
      %553 = vmatprep.mubr.f32.mxu0 0.0
      %554 = vmatmul.mubr.f32.gmra.mxu0 %v366
      %v555 = vpop.f32.mrf.mxu0
      %v556 = vadd.f32 0.0, %v555
      %v557 = vpop.f32.mrf.mxu0
      %558 = vmatprep.mubr.f32.mxu0 0.0
      %559 = vmatmul.mubr.f32.gmra.mxu0 %v369
      %v560 = vpop.f32.mrf.mxu0
      %v561 = vadd.f32 0.0, %v560
      %v562 = vpop.f32.mrf.mxu0
      %563 = vmatprep.mubr.f32.mxu0 0.0
      %564 = vmatmul.mubr.f32.gmra.mxu0 %v372
      %v565 = vpop.f32.mrf.mxu0
      %v566 = vadd.f32 0.0, %v565
      %v567 = vpop.f32.mrf.mxu0
      %568 = vmatprep.mubr.f32.mxu0 0.0
      %569 = vmatmul.mubr.f32.gmra.mxu0 %v375
      %v570 = vpop.f32.mrf.mxu0
      %v571 = vadd.f32 0.0, %v570
      %v572 = vpop.f32.mrf.mxu0
      %573 = vmatprep.mubr.f32.mxu0 0.0
      %574 = vmatmul.mubr.f32.gmra.mxu0 %v378
      %v575 = vpop.f32.mrf.mxu0
      %v576 = vadd.f32 0.0, %v575
      %v577 = vpop.f32.mrf.mxu0
      %578 = vmatprep.mubr.f32.mxu0 0.0
      %579 = vmatmul.mubr.f32.gmra.mxu0 %v381
      %v580 = vpop.f32.mrf.mxu0
      %v581 = vadd.f32 0.0, %v580
      %v582 = vpop.f32.mrf.mxu0
      %583 = vmatprep.mubr.f32.mxu0 0.0
      %584 = vmatmul.mubr.f32.gmra.mxu0 %v384
      %v585 = vpop.f32.mrf.mxu0
      %v586 = vadd.f32 0.0, %v585
      %v587 = vpop.f32.mrf.mxu0
      %588 = vmatprep.mubr.f32.mxu0 0.0
      %589 = vmatmul.mubr.f32.gmra.mxu0 %v387
      %v590 = vpop.f32.mrf.mxu0
      %v591 = vadd.f32 0.0, %v590
      %v592 = vpop.f32.mrf.mxu0
      %593 = vmatprep.mubr.f32.mxu0 0.0
      %594 = vmatmul.mubr.f32.gmra.mxu0 %v390
      %v595 = vpop.f32.mrf.mxu0
      %v596 = vadd.f32 0.0, %v595
      %v597 = vpop.f32.mrf.mxu0
      %598 = vmatprep.mubr.f32.mxu0 0.0
      %599 = vmatmul.mubr.f32.gmra.mxu0 %v393
      %v600 = vpop.f32.mrf.mxu0
      %v601 = vadd.f32 0.0, %v600
      %v602 = vpop.f32.mrf.mxu0
      %603 = vmatprep.mubr.f32.mxu0 0.0
      %604 = vmatmul.mubr.f32.gmra.mxu0 %v396
      %v605 = vpop.f32.mrf.mxu0
      %v606 = vadd.f32 0.0, %v605
      %v607 = vpop.f32.mrf.mxu0
      %608 = vmatprep.mubr.f32.mxu0 0.0
      %609 = vmatmul.mubr.f32.gmra.mxu0 %v399
      %v610 = vpop.f32.mrf.mxu0
      %v611 = vadd.f32 0.0, %v610
      %v612 = vpop.f32.mrf.mxu0
      %613 = vmatprep.mubr.f32.mxu0 0.0
      %614 = vmatmul.mubr.f32.gmra.mxu0 %v402
      %v615 = vpop.f32.mrf.mxu0
      %v616 = vadd.f32 0.0, %v615
      %v617 = vpop.f32.mrf.mxu0
      %618 = vmatprep.mubr.f32.mxu0 0.0
      %619 = vmatmul.mubr.f32.gmra.mxu0 %v405
      %v620 = vpop.f32.mrf.mxu0
      %v621 = vadd.f32 0.0, %v620
      %v622 = vpop.f32.mrf.mxu0
      %623 = vmatprep.mubr.f32.mxu0 0.0
      %624 = vmatmul.mubr.f32.gmra.mxu0 %v408
      %v625 = vpop.f32.mrf.mxu0
      %v626 = vadd.f32 0.0, %v625
      %v627 = vpop.f32.mrf.mxu0
      %628 = vmatprep.mubr.f32.mxu0 0.0
      %629 = vmatmul.mubr.f32.gmra.mxu0 %v411
      %v630 = vpop.f32.mrf.mxu0
      %v631 = vadd.f32 0.0, %v630
      %v632 = vpop.f32.mrf.mxu0
      %633 = vmatprep.mubr.f32.mxu0 0.0
      %634 = vmatmul.mubr.f32.gmra.mxu0 %v414
      %v635 = vpop.f32.mrf.mxu0
      %v636 = vadd.f32 0.0, %v635
      %v637 = vpop.f32.mrf.mxu0
      %638 = vmatprep.mubr.f32.mxu0 0.0
      %639 = vmatmul.mubr.f32.gmra.mxu0 %v417
      %v640 = vpop.f32.mrf.mxu0
      %v641 = vadd.f32 0.0, %v640
      %v642 = vpop.f32.mrf.mxu0
      %643 = vmatprep.mubr.f32.mxu0 0.0
      %644 = vmatmul.mubr.f32.gmra.mxu0 %v420
      %v645 = vpop.f32.mrf.mxu0
      %v646 = vadd.f32 0.0, %v645
      %v647 = vpop.f32.mrf.mxu0
      %648 = vmatprep.mubr.f32.mxu0 0.0
      %649 = vmatmul.mubr.f32.gmra.mxu0 %v423
      %v650 = vpop.f32.mrf.mxu0
      %v651 = vadd.f32 0.0, %v650
      %v652 = vpop.f32.mrf.mxu0
      %653 = vdwg.mxu0
      %vm654 = vcmask 64512
      %655 = vst.msk [vmem:[#allocation2] sm:$0xff] %vm654, %v496
      %656 = vst.msk [vmem:[#allocation2 + $0x8] sm:$0xff] %vm654, %v501
      %657 = vst.msk [vmem:[#allocation2 + $0x10] sm:$0xff] %vm654, %v506
      %658 = vst.msk [vmem:[#allocation2 + $0x18] sm:$0xff] %vm654, %v511
      %659 = vst.msk [vmem:[#allocation2 + $0x20] sm:$0xff] %vm654, %v516
      %660 = vst.msk [vmem:[#allocation2 + $0x28] sm:$0xff] %vm654, %v521
      %661 = vst.msk [vmem:[#allocation2 + $0x30] sm:$0xff] %vm654, %v526
      %662 = vst.msk [vmem:[#allocation2 + $0x38] sm:$0xff] %vm654, %v531
      %663 = vst.msk [vmem:[#allocation2 + $0x40] sm:$0xff] %vm654, %v536
      %664 = vst.msk [vmem:[#allocation2 + $0x48] sm:$0xff] %vm654, %v541
      %665 = vst.msk [vmem:[#allocation2 + $0x50] sm:$0xff] %vm654, %v546
      %666 = vst.msk [vmem:[#allocation2 + $0x58] sm:$0xff] %vm654, %v551
      %667 = vst.msk [vmem:[#allocation2 + $0x60] sm:$0xff] %vm654, %v556
      %668 = vst.msk [vmem:[#allocation2 + $0x68] sm:$0xff] %vm654, %v561
      %669 = vst.msk [vmem:[#allocation2 + $0x70] sm:$0xff] %vm654, %v566
      %670 = vst.msk [vmem:[#allocation2 + $0x78] sm:$0xff] %vm654, %v571
      %671 = vst.msk [vmem:[#allocation2 + $0x80] sm:$0xff] %vm654, %v576
      %672 = vst.msk [vmem:[#allocation2 + $0x88] sm:$0xff] %vm654, %v581
      %673 = vst.msk [vmem:[#allocation2 + $0x90] sm:$0xff] %vm654, %v586
      %674 = vst.msk [vmem:[#allocation2 + $0x98] sm:$0xff] %vm654, %v591
      %675 = vst.msk [vmem:[#allocation2 + $0xa0] sm:$0xff] %vm654, %v596
      %676 = vst.msk [vmem:[#allocation2 + $0xa8] sm:$0xff] %vm654, %v601
      %677 = vst.msk [vmem:[#allocation2 + $0xb0] sm:$0xff] %vm654, %v606
      %678 = vst.msk [vmem:[#allocation2 + $0xb8] sm:$0xff] %vm654, %v611
      %679 = vst.msk [vmem:[#allocation2 + $0xc0] sm:$0xff] %vm654, %v616
      %680 = vst.msk [vmem:[#allocation2 + $0xc8] sm:$0xff] %vm654, %v621
      %681 = vst.msk [vmem:[#allocation2 + $0xd0] sm:$0xff] %vm654, %v626
      %682 = vst.msk [vmem:[#allocation2 + $0xd8] sm:$0xff] %vm654, %v631
      %683 = vst.msk [vmem:[#allocation2 + $0xe0] sm:$0xff] %vm654, %v636
      %684 = vst.msk [vmem:[#allocation2 + $0xe8] sm:$0xff] %vm654, %v641
      %685 = vst.msk [vmem:[#allocation2 + $0xf0] sm:$0xff] %vm654, %v646
      %686 = vst.msk [vmem:[#allocation2 + $0xf8] sm:$0xff] %vm654, %v651
      %v687 = vld [vmem:[%s271 + $0x10] sm:$0xff]
      %v688 = vld [vmem:[%s271 + $0x18] sm:$0xff]
      %v689 = vld [vmem:[%s271 + $0x20] sm:$0xff]
      %v690 = vld [vmem:[%s271 + $0x28] sm:$0xff]
      %v691 = vld [vmem:[%s271 + $0x30] sm:$0xff]
      %v692 = vld [vmem:[%s271 + $0x38] sm:$0xff]
      %v693 = vld [vmem:[%s271 + $0x40] sm:$0xff]
      %v694 = vld [vmem:[%s271 + $0x48] sm:$0xff]
      %v695 = vld [vmem:[%s271 + $0x50] sm:$0xff]
      %v696 = vld [vmem:[%s271 + $0x58] sm:$0xff]
      %v697 = vld [vmem:[%s271 + $0x60] sm:$0xff]
      %v698 = vld [vmem:[%s271 + $0x68] sm:$0xff]
      %v699 = vld [vmem:[%s271 + $0x70] sm:$0xff]
      %v700 = vld [vmem:[%s271 + $0x78] sm:$0xff]
      %v701 = vld [vmem:[%s271 + $0x80] sm:$0xff]
      %v702 = vld [vmem:[%s271 + $0x88] sm:$0xff]
      %v703 = vld [vmem:[%s271 + $0x90] sm:$0xff]
      %v704 = vld [vmem:[%s271 + $0x98] sm:$0xff]
      %v705 = vld [vmem:[%s271 + $0xa0] sm:$0xff]
      %v706 = vld [vmem:[%s271 + $0xa8] sm:$0xff]
      %v707 = vld [vmem:[%s271 + $0xb0] sm:$0xff]
      %v708 = vld [vmem:[%s271 + $0xb8] sm:$0xff]
      %v709 = vld [vmem:[%s271 + $0xc0] sm:$0xff]
      %v710 = vld [vmem:[%s271 + $0xc8] sm:$0xff]
      %v711 = vld [vmem:[%s271 + $0xd0] sm:$0xff]
      %v712 = vld [vmem:[%s271 + $0xd8] sm:$0xff]
      %v713 = vld [vmem:[%s271 + $0xe0] sm:$0xff]
      %v714 = vld [vmem:[%s271 + $0xe8] sm:$0xff]
      %v715 = vld [vmem:[%s271 + $0xf0] sm:$0xff]
      %v716 = vld [vmem:[%s271 + $0xf8] sm:$0xff]
      %v717 = vld [vmem:[%s271 + $0x100] sm:$0xff]
      %v718 = vld [vmem:[%s271 + $0x108] sm:$0xff]
      %s719 = scalar_lea.vmem %s275, 16
      %v720 = vld [vmem:[%s719] sm:$0xff]
      %v721 = vld [vmem:[%s719 + $0x8] sm:$0xf]
      %v723 = vsel %vm328, %v687, 0
      %v726 = vsel %vm328, %v688, 0
      %v729 = vsel %vm328, %v689, 0
      %v732 = vsel %vm328, %v690, 0
      %v735 = vsel %vm328, %v691, 0
      %v738 = vsel %vm328, %v692, 0
      %v741 = vsel %vm328, %v693, 0
      %v744 = vsel %vm328, %v694, 0
      %v747 = vsel %vm328, %v695, 0
      %v750 = vsel %vm328, %v696, 0
      %v753 = vsel %vm328, %v697, 0
      %v756 = vsel %vm328, %v698, 0
      %v759 = vsel %vm328, %v699, 0
      %v762 = vsel %vm328, %v700, 0
      %v765 = vsel %vm328, %v701, 0
      %v768 = vsel %vm328, %v702, 0
      %v771 = vsel %vm328, %v703, 0
      %v774 = vsel %vm328, %v704, 0
      %v777 = vsel %vm328, %v705, 0
      %v780 = vsel %vm328, %v706, 0
      %v783 = vsel %vm328, %v707, 0
      %v786 = vsel %vm328, %v708, 0
      %v789 = vsel %vm328, %v709, 0
      %v792 = vsel %vm328, %v710, 0
      %v795 = vsel %vm328, %v711, 0
      %v798 = vsel %vm328, %v712, 0
      %v801 = vsel %vm328, %v713, 0
      %v804 = vsel %vm328, %v714, 0
      %v807 = vsel %vm328, %v715, 0
      %v810 = vsel %vm328, %v716, 0
      %v813 = vsel %vm328, %v717, 0
      %v816 = vsel %vm328, %v718, 0
      %v819 = vsel %vm425, %v721, 0
      %821 = vmatprep.subr.mxu0 0.0
      %822 = vmatpush1.msra.mxu0 0.0
      %823 = vmatprep.subr.mxu0 0.0
      %824 = vmatpush1.msra.mxu0 0.0
      %825 = vmatprep.subr.mxu0 0.0
      %826 = vmatpush1.msra.mxu0 0.0
      %827 = vmatprep.subr.mxu0 0.0
      %828 = vmatpush1.msra.mxu0 0.0
      %829 = vmatprep.subr.mxu0 0.0
      %830 = vmatpush1.msra.mxu0 0.0
      %831 = vmatprep.subr.mxu0 0.0
      %832 = vmatpush1.msra.mxu0 0.0
      %833 = vmatprep.subr.mxu0 0.0
      %834 = vmatpush1.msra.mxu0 0.0
      %835 = vmatprep.subr.mxu0 0.0
      %836 = vmatpush1.msra.mxu0 0.0
      %837 = vmatprep.subr.mxu0 0.0
      %838 = vmatpush1.msra.mxu0 0.0
      %839 = vmatprep.subr.mxu0 0.0
      %840 = vmatpush1.msra.mxu0 0.0
      %841 = vmatprep.subr.mxu0 0.0
      %842 = vmatpush1.msra.mxu0 0.0
      %843 = vmatprep.subr.mxu0 0.0
      %844 = vmatpush1.msra.mxu0 0.0
      %845 = vmatprep.subr.mxu0 0.0
      %846 = vmatpush1.msra.mxu0 0.0
      %847 = vmatprep.subr.mxu0 0.0
      %848 = vmatpush1.msra.mxu0 0.0
      %849 = vmatprep.subr.mxu0 0.0
      %850 = vmatpush1.msra.mxu0 %v819
      %851 = vmatprep.subr.mxu0 0.0
      %852 = vmatpush1.msra.mxu0 %v720
      %853 = vmatprep.subr.mxu0 0.0
      %854 = vmatpush2.msra.mxu0 0.0
      %855 = vmatprep.subr.mxu0 0.0
      %856 = vmatpush2.msra.mxu0 0.0
      %857 = vmatprep.subr.mxu0 0.0
      %858 = vmatpush2.msra.mxu0 0.0
      %859 = vmatprep.subr.mxu0 0.0
      %860 = vmatpush2.msra.mxu0 0.0
      %861 = vmatprep.subr.mxu0 0.0
      %862 = vmatpush2.msra.mxu0 0.0
      %863 = vmatprep.subr.mxu0 0.0
      %864 = vmatpush2.msra.mxu0 0.0
      %865 = vmatprep.subr.mxu0 0.0
      %866 = vmatpush2.msra.mxu0 0.0
      %867 = vmatprep.subr.mxu0 0.0
      %868 = vmatpush2.msra.mxu0 0.0
      %869 = vmatprep.subr.mxu0 0.0
      %870 = vmatpush2.msra.mxu0 0.0
      %871 = vmatprep.subr.mxu0 0.0
      %872 = vmatpush2.msra.mxu0 0.0
      %873 = vmatprep.subr.mxu0 0.0
      %874 = vmatpush2.msra.mxu0 0.0
      %875 = vmatprep.subr.mxu0 0.0
      %876 = vmatpush2.msra.mxu0 0.0
      %877 = vmatprep.subr.mxu0 0.0
      %878 = vmatpush2.msra.mxu0 0.0
      %879 = vmatprep.subr.mxu0 0.0
      %880 = vmatpush2.msra.mxu0 0.0
      %881 = vmatprep.subr.mxu0 0.0
      %882 = vmatpush2.msra.mxu0 0.0
      %883 = vmatprep.subr.mxu0 0.0
      %884 = vmatpush2.msra.mxu0 0.0
      %885 = vmatprep.mubr.f32.mxu0 0.0
      %886 = vmatmul.mubr.f32.gmra.mxu0 %v723
      %v887 = vpop.f32.mrf.mxu0
      %v888 = vadd.f32 0.0, %v887
      %v889 = vpop.f32.mrf.mxu0
      %890 = vmatprep.mubr.f32.mxu0 0.0
      %891 = vmatmul.mubr.f32.gmra.mxu0 %v726
      %v892 = vpop.f32.mrf.mxu0
      %v893 = vadd.f32 0.0, %v892
      %v894 = vpop.f32.mrf.mxu0
      %895 = vmatprep.mubr.f32.mxu0 0.0
      %896 = vmatmul.mubr.f32.gmra.mxu0 %v729
      %v897 = vpop.f32.mrf.mxu0
      %v898 = vadd.f32 0.0, %v897
      %v899 = vpop.f32.mrf.mxu0
      %900 = vmatprep.mubr.f32.mxu0 0.0
      %901 = vmatmul.mubr.f32.gmra.mxu0 %v732
      %v902 = vpop.f32.mrf.mxu0
      %v903 = vadd.f32 0.0, %v902
      %v904 = vpop.f32.mrf.mxu0
      %905 = vmatprep.mubr.f32.mxu0 0.0
      %906 = vmatmul.mubr.f32.gmra.mxu0 %v735
      %v907 = vpop.f32.mrf.mxu0
      %v908 = vadd.f32 0.0, %v907
      %v909 = vpop.f32.mrf.mxu0
      %910 = vmatprep.mubr.f32.mxu0 0.0
      %911 = vmatmul.mubr.f32.gmra.mxu0 %v738
      %v912 = vpop.f32.mrf.mxu0
      %v913 = vadd.f32 0.0, %v912
      %v914 = vpop.f32.mrf.mxu0
      %915 = vmatprep.mubr.f32.mxu0 0.0
      %916 = vmatmul.mubr.f32.gmra.mxu0 %v741
      %v917 = vpop.f32.mrf.mxu0
      %v918 = vadd.f32 0.0, %v917
      %v919 = vpop.f32.mrf.mxu0
      %920 = vmatprep.mubr.f32.mxu0 0.0
      %921 = vmatmul.mubr.f32.gmra.mxu0 %v744
      %v922 = vpop.f32.mrf.mxu0
      %v923 = vadd.f32 0.0, %v922
      %v924 = vpop.f32.mrf.mxu0
      %925 = vmatprep.mubr.f32.mxu0 0.0
      %926 = vmatmul.mubr.f32.gmra.mxu0 %v747
      %v927 = vpop.f32.mrf.mxu0
      %v928 = vadd.f32 0.0, %v927
      %v929 = vpop.f32.mrf.mxu0
      %930 = vmatprep.mubr.f32.mxu0 0.0
      %931 = vmatmul.mubr.f32.gmra.mxu0 %v750
      %v932 = vpop.f32.mrf.mxu0
      %v933 = vadd.f32 0.0, %v932
      %v934 = vpop.f32.mrf.mxu0
      %935 = vmatprep.mubr.f32.mxu0 0.0
      %936 = vmatmul.mubr.f32.gmra.mxu0 %v753
      %v937 = vpop.f32.mrf.mxu0
      %v938 = vadd.f32 0.0, %v937
      %v939 = vpop.f32.mrf.mxu0
      %940 = vmatprep.mubr.f32.mxu0 0.0
      %941 = vmatmul.mubr.f32.gmra.mxu0 %v756
      %v942 = vpop.f32.mrf.mxu0
      %v943 = vadd.f32 0.0, %v942
      %v944 = vpop.f32.mrf.mxu0
      %945 = vmatprep.mubr.f32.mxu0 0.0
      %946 = vmatmul.mubr.f32.gmra.mxu0 %v759
      %v947 = vpop.f32.mrf.mxu0
      %v948 = vadd.f32 0.0, %v947
      %v949 = vpop.f32.mrf.mxu0
      %950 = vmatprep.mubr.f32.mxu0 0.0
      %951 = vmatmul.mubr.f32.gmra.mxu0 %v762
      %v952 = vpop.f32.mrf.mxu0
      %v953 = vadd.f32 0.0, %v952
      %v954 = vpop.f32.mrf.mxu0
      %955 = vmatprep.mubr.f32.mxu0 0.0
      %956 = vmatmul.mubr.f32.gmra.mxu0 %v765
      %v957 = vpop.f32.mrf.mxu0
      %v958 = vadd.f32 0.0, %v957
      %v959 = vpop.f32.mrf.mxu0
      %960 = vmatprep.mubr.f32.mxu0 0.0
      %961 = vmatmul.mubr.f32.gmra.mxu0 %v768
      %v962 = vpop.f32.mrf.mxu0
      %v963 = vadd.f32 0.0, %v962
      %v964 = vpop.f32.mrf.mxu0
      %965 = vmatprep.mubr.f32.mxu0 0.0
      %966 = vmatmul.mubr.f32.gmra.mxu0 %v771
      %v967 = vpop.f32.mrf.mxu0
      %v968 = vadd.f32 0.0, %v967
      %v969 = vpop.f32.mrf.mxu0
      %970 = vmatprep.mubr.f32.mxu0 0.0
      %971 = vmatmul.mubr.f32.gmra.mxu0 %v774
      %v972 = vpop.f32.mrf.mxu0
      %v973 = vadd.f32 0.0, %v972
      %v974 = vpop.f32.mrf.mxu0
      %975 = vmatprep.mubr.f32.mxu0 0.0
      %976 = vmatmul.mubr.f32.gmra.mxu0 %v777
      %v977 = vpop.f32.mrf.mxu0
      %v978 = vadd.f32 0.0, %v977
      %v979 = vpop.f32.mrf.mxu0
      %980 = vmatprep.mubr.f32.mxu0 0.0
      %981 = vmatmul.mubr.f32.gmra.mxu0 %v780
      %v982 = vpop.f32.mrf.mxu0
      %v983 = vadd.f32 0.0, %v982
      %v984 = vpop.f32.mrf.mxu0
      %985 = vmatprep.mubr.f32.mxu0 0.0
      %986 = vmatmul.mubr.f32.gmra.mxu0 %v783
      %v987 = vpop.f32.mrf.mxu0
      %v988 = vadd.f32 0.0, %v987
      %v989 = vpop.f32.mrf.mxu0
      %990 = vmatprep.mubr.f32.mxu0 0.0
      %991 = vmatmul.mubr.f32.gmra.mxu0 %v786
      %v992 = vpop.f32.mrf.mxu0
      %v993 = vadd.f32 0.0, %v992
      %v994 = vpop.f32.mrf.mxu0
      %995 = vmatprep.mubr.f32.mxu0 0.0
      %996 = vmatmul.mubr.f32.gmra.mxu0 %v789
      %v997 = vpop.f32.mrf.mxu0
      %v998 = vadd.f32 0.0, %v997
      %v999 = vpop.f32.mrf.mxu0
      %1000 = vmatprep.mubr.f32.mxu0 0.0
      %1001 = vmatmul.mubr.f32.gmra.mxu0 %v792
      %v1002 = vpop.f32.mrf.mxu0
      %v1003 = vadd.f32 0.0, %v1002
      %v1004 = vpop.f32.mrf.mxu0
      %1005 = vmatprep.mubr.f32.mxu0 0.0
      %1006 = vmatmul.mubr.f32.gmra.mxu0 %v795
      %v1007 = vpop.f32.mrf.mxu0
      %v1008 = vadd.f32 0.0, %v1007
      %v1009 = vpop.f32.mrf.mxu0
      %1010 = vmatprep.mubr.f32.mxu0 0.0
      %1011 = vmatmul.mubr.f32.gmra.mxu0 %v798
      %v1012 = vpop.f32.mrf.mxu0
      %v1013 = vadd.f32 0.0, %v1012
      %v1014 = vpop.f32.mrf.mxu0
      %1015 = vmatprep.mubr.f32.mxu0 0.0
      %1016 = vmatmul.mubr.f32.gmra.mxu0 %v801
      %v1017 = vpop.f32.mrf.mxu0
      %v1018 = vadd.f32 0.0, %v1017
      %v1019 = vpop.f32.mrf.mxu0
      %1020 = vmatprep.mubr.f32.mxu0 0.0
      %1021 = vmatmul.mubr.f32.gmra.mxu0 %v804
      %v1022 = vpop.f32.mrf.mxu0
      %v1023 = vadd.f32 0.0, %v1022
      %v1024 = vpop.f32.mrf.mxu0
      %1025 = vmatprep.mubr.f32.mxu0 0.0
      %1026 = vmatmul.mubr.f32.gmra.mxu0 %v807
      %v1027 = vpop.f32.mrf.mxu0
      %v1028 = vadd.f32 0.0, %v1027
      %v1029 = vpop.f32.mrf.mxu0
      %1030 = vmatprep.mubr.f32.mxu0 0.0
      %1031 = vmatmul.mubr.f32.gmra.mxu0 %v810
      %v1032 = vpop.f32.mrf.mxu0
      %v1033 = vadd.f32 0.0, %v1032
      %v1034 = vpop.f32.mrf.mxu0
      %1035 = vmatprep.mubr.f32.mxu0 0.0
      %1036 = vmatmul.mubr.f32.gmra.mxu0 %v813
      %v1037 = vpop.f32.mrf.mxu0
      %v1038 = vadd.f32 0.0, %v1037
      %v1039 = vpop.f32.mrf.mxu0
      %1040 = vmatprep.mubr.f32.mxu0 0.0
      %1041 = vmatmul.mubr.f32.gmra.mxu0 %v816
      %v1042 = vpop.f32.mrf.mxu0
      %v1043 = vadd.f32 0.0, %v1042
      %v1044 = vpop.f32.mrf.mxu0
      %1045 = vdwg.mxu0
      %v1046 = vld [vmem:[#allocation2] sm:$0xff]
      %v1047 = vld [vmem:[#allocation2 + $0x8] sm:$0xff]
      %v1048 = vld [vmem:[#allocation2 + $0x10] sm:$0xff]
      %v1049 = vld [vmem:[#allocation2 + $0x18] sm:$0xff]
      %v1050 = vld [vmem:[#allocation2 + $0x20] sm:$0xff]
      %v1051 = vld [vmem:[#allocation2 + $0x28] sm:$0xff]
      %v1052 = vld [vmem:[#allocation2 + $0x30] sm:$0xff]
      %v1053 = vld [vmem:[#allocation2 + $0x38] sm:$0xff]
      %v1054 = vld [vmem:[#allocation2 + $0x40] sm:$0xff]
      %v1055 = vld [vmem:[#allocation2 + $0x48] sm:$0xff]
      %v1056 = vld [vmem:[#allocation2 + $0x50] sm:$0xff]
      %v1057 = vld [vmem:[#allocation2 + $0x58] sm:$0xff]
      %v1058 = vld [vmem:[#allocation2 + $0x60] sm:$0xff]
      %v1059 = vld [vmem:[#allocation2 + $0x68] sm:$0xff]
      %v1060 = vld [vmem:[#allocation2 + $0x70] sm:$0xff]
      %v1061 = vld [vmem:[#allocation2 + $0x78] sm:$0xff]
      %v1062 = vld [vmem:[#allocation2 + $0x80] sm:$0xff]
      %v1063 = vld [vmem:[#allocation2 + $0x88] sm:$0xff]
      %v1064 = vld [vmem:[#allocation2 + $0x90] sm:$0xff]
      %v1065 = vld [vmem:[#allocation2 + $0x98] sm:$0xff]
      %v1066 = vld [vmem:[#allocation2 + $0xa0] sm:$0xff]
      %v1067 = vld [vmem:[#allocation2 + $0xa8] sm:$0xff]
      %v1068 = vld [vmem:[#allocation2 + $0xb0] sm:$0xff]
      %v1069 = vld [vmem:[#allocation2 + $0xb8] sm:$0xff]
      %v1070 = vld [vmem:[#allocation2 + $0xc0] sm:$0xff]
      %v1071 = vld [vmem:[#allocation2 + $0xc8] sm:$0xff]
      %v1072 = vld [vmem:[#allocation2 + $0xd0] sm:$0xff]
      %v1073 = vld [vmem:[#allocation2 + $0xd8] sm:$0xff]
      %v1074 = vld [vmem:[#allocation2 + $0xe0] sm:$0xff]
      %v1075 = vld [vmem:[#allocation2 + $0xe8] sm:$0xff]
      %v1076 = vld [vmem:[#allocation2 + $0xf0] sm:$0xff]
      %v1077 = vld [vmem:[#allocation2 + $0xf8] sm:$0xff]
      %v1078 = vadd.f32 %v1046, %v888
      %v1079 = vadd.f32 %v1047, %v893
      %v1080 = vadd.f32 %v1048, %v898
      %v1081 = vadd.f32 %v1049, %v903
      %v1082 = vadd.f32 %v1050, %v908
      %v1083 = vadd.f32 %v1051, %v913
      %v1084 = vadd.f32 %v1052, %v918
      %v1085 = vadd.f32 %v1053, %v923
      %v1086 = vadd.f32 %v1054, %v928
      %v1087 = vadd.f32 %v1055, %v933
      %v1088 = vadd.f32 %v1056, %v938
      %v1089 = vadd.f32 %v1057, %v943
      %v1090 = vadd.f32 %v1058, %v948
      %v1091 = vadd.f32 %v1059, %v953
      %v1092 = vadd.f32 %v1060, %v958
      %v1093 = vadd.f32 %v1061, %v963
      %v1094 = vadd.f32 %v1062, %v968
      %v1095 = vadd.f32 %v1063, %v973
      %v1096 = vadd.f32 %v1064, %v978
      %v1097 = vadd.f32 %v1065, %v983
      %v1098 = vadd.f32 %v1066, %v988
      %v1099 = vadd.f32 %v1067, %v993
      %v1100 = vadd.f32 %v1068, %v998
      %v1101 = vadd.f32 %v1069, %v1003
      %v1102 = vadd.f32 %v1070, %v1008
      %v1103 = vadd.f32 %v1071, %v1013
      %v1104 = vadd.f32 %v1072, %v1018
      %v1105 = vadd.f32 %v1073, %v1023
      %v1106 = vadd.f32 %v1074, %v1028
      %v1107 = vadd.f32 %v1075, %v1033
      %v1108 = vadd.f32 %v1076, %v1038
      %v1109 = vadd.f32 %v1077, %v1043
      %1110 = vst.msk [vmem:[#allocation2] sm:$0xff] %vm654, %v1078
      %1111 = vst.msk [vmem:[#allocation2 + $0x8] sm:$0xff] %vm654, %v1079
      %1112 = vst.msk [vmem:[#allocation2 + $0x10] sm:$0xff] %vm654, %v1080
      %1113 = vst.msk [vmem:[#allocation2 + $0x18] sm:$0xff] %vm654, %v1081
      %1114 = vst.msk [vmem:[#allocation2 + $0x20] sm:$0xff] %vm654, %v1082
      %1115 = vst.msk [vmem:[#allocation2 + $0x28] sm:$0xff] %vm654, %v1083
      %1116 = vst.msk [vmem:[#allocation2 + $0x30] sm:$0xff] %vm654, %v1084
      %1117 = vst.msk [vmem:[#allocation2 + $0x38] sm:$0xff] %vm654, %v1085
      %1118 = vst.msk [vmem:[#allocation2 + $0x40] sm:$0xff] %vm654, %v1086
      %1119 = vst.msk [vmem:[#allocation2 + $0x48] sm:$0xff] %vm654, %v1087
      %1120 = vst.msk [vmem:[#allocation2 + $0x50] sm:$0xff] %vm654, %v1088
      %1121 = vst.msk [vmem:[#allocation2 + $0x58] sm:$0xff] %vm654, %v1089
      %1122 = vst.msk [vmem:[#allocation2 + $0x60] sm:$0xff] %vm654, %v1090
      %1123 = vst.msk [vmem:[#allocation2 + $0x68] sm:$0xff] %vm654, %v1091
      %1124 = vst.msk [vmem:[#allocation2 + $0x70] sm:$0xff] %vm654, %v1092
      %1125 = vst.msk [vmem:[#allocation2 + $0x78] sm:$0xff] %vm654, %v1093
      %1126 = vst.msk [vmem:[#allocation2 + $0x80] sm:$0xff] %vm654, %v1094
      %1127 = vst.msk [vmem:[#allocation2 + $0x88] sm:$0xff] %vm654, %v1095
      %1128 = vst.msk [vmem:[#allocation2 + $0x90] sm:$0xff] %vm654, %v1096
      %1129 = vst.msk [vmem:[#allocation2 + $0x98] sm:$0xff] %vm654, %v1097
      %1130 = vst.msk [vmem:[#allocation2 + $0xa0] sm:$0xff] %vm654, %v1098
      %1131 = vst.msk [vmem:[#allocation2 + $0xa8] sm:$0xff] %vm654, %v1099
      %1132 = vst.msk [vmem:[#allocation2 + $0xb0] sm:$0xff] %vm654, %v1100
      %1133 = vst.msk [vmem:[#allocation2 + $0xb8] sm:$0xff] %vm654, %v1101
      %1134 = vst.msk [vmem:[#allocation2 + $0xc0] sm:$0xff] %vm654, %v1102
      %1135 = vst.msk [vmem:[#allocation2 + $0xc8] sm:$0xff] %vm654, %v1103
      %1136 = vst.msk [vmem:[#allocation2 + $0xd0] sm:$0xff] %vm654, %v1104
      %1137 = vst.msk [vmem:[#allocation2 + $0xd8] sm:$0xff] %vm654, %v1105
      %1138 = vst.msk [vmem:[#allocation2 + $0xe0] sm:$0xff] %vm654, %v1106
      %1139 = vst.msk [vmem:[#allocation2 + $0xe8] sm:$0xff] %vm654, %v1107
      %1140 = vst.msk [vmem:[#allocation2 + $0xf0] sm:$0xff] %vm654, %v1108
      %1141 = vst.msk [vmem:[#allocation2 + $0xf8] sm:$0xff] %vm654, %v1109
      %v1142 = vld [vmem:[%s271 + $0x20] sm:$0xff]
      %v1143 = vld [vmem:[%s271 + $0x28] sm:$0xff]
      %v1144 = vld [vmem:[%s271 + $0x30] sm:$0xff]
      %v1145 = vld [vmem:[%s271 + $0x38] sm:$0xff]
      %v1146 = vld [vmem:[%s271 + $0x40] sm:$0xff]
      %v1147 = vld [vmem:[%s271 + $0x48] sm:$0xff]
      %v1148 = vld [vmem:[%s271 + $0x50] sm:$0xff]
      %v1149 = vld [vmem:[%s271 + $0x58] sm:$0xff]
      %v1150 = vld [vmem:[%s271 + $0x60] sm:$0xff]
      %v1151 = vld [vmem:[%s271 + $0x68] sm:$0xff]
      %v1152 = vld [vmem:[%s271 + $0x70] sm:$0xff]
      %v1153 = vld [vmem:[%s271 + $0x78] sm:$0xff]
      %v1154 = vld [vmem:[%s271 + $0x80] sm:$0xff]
      %v1155 = vld [vmem:[%s271 + $0x88] sm:$0xff]
      %v1156 = vld [vmem:[%s271 + $0x90] sm:$0xff]
      %v1157 = vld [vmem:[%s271 + $0x98] sm:$0xff]
      %v1158 = vld [vmem:[%s271 + $0xa0] sm:$0xff]
      %v1159 = vld [vmem:[%s271 + $0xa8] sm:$0xff]
      %v1160 = vld [vmem:[%s271 + $0xb0] sm:$0xff]
      %v1161 = vld [vmem:[%s271 + $0xb8] sm:$0xff]
      %v1162 = vld [vmem:[%s271 + $0xc0] sm:$0xff]
      %v1163 = vld [vmem:[%s271 + $0xc8] sm:$0xff]
      %v1164 = vld [vmem:[%s271 + $0xd0] sm:$0xff]
      %v1165 = vld [vmem:[%s271 + $0xd8] sm:$0xff]
      %v1166 = vld [vmem:[%s271 + $0xe0] sm:$0xff]
      %v1167 = vld [vmem:[%s271 + $0xe8] sm:$0xff]
      %v1168 = vld [vmem:[%s271 + $0xf0] sm:$0xff]
      %v1169 = vld [vmem:[%s271 + $0xf8] sm:$0xff]
      %v1170 = vld [vmem:[%s271 + $0x100] sm:$0xff]
      %v1171 = vld [vmem:[%s271 + $0x108] sm:$0xff]
      %v1172 = vld [vmem:[%s271 + $0x110] sm:$0xff]
      %v1173 = vld [vmem:[%s271 + $0x118] sm:$0xff]
      %s1174 = scalar_lea.vmem %s275, 32
      %v1175 = vld [vmem:[%s1174] sm:$0xff]
      %v1176 = vld [vmem:[%s1174 + $0x8] sm:$0xf]
      %v1178 = vsel %vm328, %v1142, 0
      %v1181 = vsel %vm328, %v1143, 0
      %v1184 = vsel %vm328, %v1144, 0
      %v1187 = vsel %vm328, %v1145, 0
      %v1190 = vsel %vm328, %v1146, 0
      %v1193 = vsel %vm328, %v1147, 0
      %v1196 = vsel %vm328, %v1148, 0
      %v1199 = vsel %vm328, %v1149, 0
      %v1202 = vsel %vm328, %v1150, 0
      %v1205 = vsel %vm328, %v1151, 0
      %v1208 = vsel %vm328, %v1152, 0
      %v1211 = vsel %vm328, %v1153, 0
      %v1214 = vsel %vm328, %v1154, 0
      %v1217 = vsel %vm328, %v1155, 0
      %v1220 = vsel %vm328, %v1156, 0
      %v1223 = vsel %vm328, %v1157, 0
      %v1226 = vsel %vm328, %v1158, 0
      %v1229 = vsel %vm328, %v1159, 0
      %v1232 = vsel %vm328, %v1160, 0
      %v1235 = vsel %vm328, %v1161, 0
      %v1238 = vsel %vm328, %v1162, 0
      %v1241 = vsel %vm328, %v1163, 0
      %v1244 = vsel %vm328, %v1164, 0
      %v1247 = vsel %vm328, %v1165, 0
      %v1250 = vsel %vm328, %v1166, 0
      %v1253 = vsel %vm328, %v1167, 0
      %v1256 = vsel %vm328, %v1168, 0
      %v1259 = vsel %vm328, %v1169, 0
      %v1262 = vsel %vm328, %v1170, 0
      %v1265 = vsel %vm328, %v1171, 0
      %v1268 = vsel %vm328, %v1172, 0
      %v1271 = vsel %vm328, %v1173, 0
      %v1274 = vsel %vm425, %v1176, 0
      %1276 = vmatprep.subr.mxu0 0.0
      %1277 = vmatpush1.msra.mxu0 0.0
      %1278 = vmatprep.subr.mxu0 0.0
      %1279 = vmatpush1.msra.mxu0 0.0
      %1280 = vmatprep.subr.mxu0 0.0
      %1281 = vmatpush1.msra.mxu0 0.0
      %1282 = vmatprep.subr.mxu0 0.0
      %1283 = vmatpush1.msra.mxu0 0.0
      %1284 = vmatprep.subr.mxu0 0.0
      %1285 = vmatpush1.msra.mxu0 0.0
      %1286 = vmatprep.subr.mxu0 0.0
      %1287 = vmatpush1.msra.mxu0 0.0
      %1288 = vmatprep.subr.mxu0 0.0
      %1289 = vmatpush1.msra.mxu0 0.0
      %1290 = vmatprep.subr.mxu0 0.0
      %1291 = vmatpush1.msra.mxu0 0.0
      %1292 = vmatprep.subr.mxu0 0.0
      %1293 = vmatpush1.msra.mxu0 0.0
      %1294 = vmatprep.subr.mxu0 0.0
      %1295 = vmatpush1.msra.mxu0 0.0
      %1296 = vmatprep.subr.mxu0 0.0
      %1297 = vmatpush1.msra.mxu0 0.0
      %1298 = vmatprep.subr.mxu0 0.0
      %1299 = vmatpush1.msra.mxu0 0.0
      %1300 = vmatprep.subr.mxu0 0.0
      %1301 = vmatpush1.msra.mxu0 0.0
      %1302 = vmatprep.subr.mxu0 0.0
      %1303 = vmatpush1.msra.mxu0 0.0
      %1304 = vmatprep.subr.mxu0 0.0
      %1305 = vmatpush1.msra.mxu0 %v1274
      %1306 = vmatprep.subr.mxu0 0.0
      %1307 = vmatpush1.msra.mxu0 %v1175
      %1308 = vmatprep.subr.mxu0 0.0
      %1309 = vmatpush2.msra.mxu0 0.0
      %1310 = vmatprep.subr.mxu0 0.0
      %1311 = vmatpush2.msra.mxu0 0.0
      %1312 = vmatprep.subr.mxu0 0.0
      %1313 = vmatpush2.msra.mxu0 0.0
      %1314 = vmatprep.subr.mxu0 0.0
      %1315 = vmatpush2.msra.mxu0 0.0
      %1316 = vmatprep.subr.mxu0 0.0
      %1317 = vmatpush2.msra.mxu0 0.0
      %1318 = vmatprep.subr.mxu0 0.0
      %1319 = vmatpush2.msra.mxu0 0.0
      %1320 = vmatprep.subr.mxu0 0.0
      %1321 = vmatpush2.msra.mxu0 0.0
      %1322 = vmatprep.subr.mxu0 0.0
      %1323 = vmatpush2.msra.mxu0 0.0
      %1324 = vmatprep.subr.mxu0 0.0
      %1325 = vmatpush2.msra.mxu0 0.0
      %1326 = vmatprep.subr.mxu0 0.0
      %1327 = vmatpush2.msra.mxu0 0.0
      %1328 = vmatprep.subr.mxu0 0.0
      %1329 = vmatpush2.msra.mxu0 0.0
      %1330 = vmatprep.subr.mxu0 0.0
      %1331 = vmatpush2.msra.mxu0 0.0
      %1332 = vmatprep.subr.mxu0 0.0
      %1333 = vmatpush2.msra.mxu0 0.0
      %1334 = vmatprep.subr.mxu0 0.0
      %1335 = vmatpush2.msra.mxu0 0.0
      %1336 = vmatprep.subr.mxu0 0.0
      %1337 = vmatpush2.msra.mxu0 0.0
      %1338 = vmatprep.subr.mxu0 0.0
      %1339 = vmatpush2.msra.mxu0 0.0
      %1340 = vmatprep.mubr.f32.mxu0 0.0
      %1341 = vmatmul.mubr.f32.gmra.mxu0 %v1178
      %v1342 = vpop.f32.mrf.mxu0
      %v1343 = vadd.f32 0.0, %v1342
      %v1344 = vpop.f32.mrf.mxu0
      %1345 = vmatprep.mubr.f32.mxu0 0.0
      %1346 = vmatmul.mubr.f32.gmra.mxu0 %v1181
      %v1347 = vpop.f32.mrf.mxu0
      %v1348 = vadd.f32 0.0, %v1347
      %v1349 = vpop.f32.mrf.mxu0
      %1350 = vmatprep.mubr.f32.mxu0 0.0
      %1351 = vmatmul.mubr.f32.gmra.mxu0 %v1184
      %v1352 = vpop.f32.mrf.mxu0
      %v1353 = vadd.f32 0.0, %v1352
      %v1354 = vpop.f32.mrf.mxu0
      %1355 = vmatprep.mubr.f32.mxu0 0.0
      %1356 = vmatmul.mubr.f32.gmra.mxu0 %v1187
      %v1357 = vpop.f32.mrf.mxu0
      %v1358 = vadd.f32 0.0, %v1357
      %v1359 = vpop.f32.mrf.mxu0
      %1360 = vmatprep.mubr.f32.mxu0 0.0
      %1361 = vmatmul.mubr.f32.gmra.mxu0 %v1190
      %v1362 = vpop.f32.mrf.mxu0
      %v1363 = vadd.f32 0.0, %v1362
      %v1364 = vpop.f32.mrf.mxu0
      %1365 = vmatprep.mubr.f32.mxu0 0.0
      %1366 = vmatmul.mubr.f32.gmra.mxu0 %v1193
      %v1367 = vpop.f32.mrf.mxu0
      %v1368 = vadd.f32 0.0, %v1367
      %v1369 = vpop.f32.mrf.mxu0
      %1370 = vmatprep.mubr.f32.mxu0 0.0
      %1371 = vmatmul.mubr.f32.gmra.mxu0 %v1196
      %v1372 = vpop.f32.mrf.mxu0
      %v1373 = vadd.f32 0.0, %v1372
      %v1374 = vpop.f32.mrf.mxu0
      %1375 = vmatprep.mubr.f32.mxu0 0.0
      %1376 = vmatmul.mubr.f32.gmra.mxu0 %v1199
      %v1377 = vpop.f32.mrf.mxu0
      %v1378 = vadd.f32 0.0, %v1377
      %v1379 = vpop.f32.mrf.mxu0
      %1380 = vmatprep.mubr.f32.mxu0 0.0
      %1381 = vmatmul.mubr.f32.gmra.mxu0 %v1202
      %v1382 = vpop.f32.mrf.mxu0
      %v1383 = vadd.f32 0.0, %v1382
      %v1384 = vpop.f32.mrf.mxu0
      %1385 = vmatprep.mubr.f32.mxu0 0.0
      %1386 = vmatmul.mubr.f32.gmra.mxu0 %v1205
      %v1387 = vpop.f32.mrf.mxu0
      %v1388 = vadd.f32 0.0, %v1387
      %v1389 = vpop.f32.mrf.mxu0
      %1390 = vmatprep.mubr.f32.mxu0 0.0
      %1391 = vmatmul.mubr.f32.gmra.mxu0 %v1208
      %v1392 = vpop.f32.mrf.mxu0
      %v1393 = vadd.f32 0.0, %v1392
      %v1394 = vpop.f32.mrf.mxu0
      %1395 = vmatprep.mubr.f32.mxu0 0.0
      %1396 = vmatmul.mubr.f32.gmra.mxu0 %v1211
      %v1397 = vpop.f32.mrf.mxu0
      %v1398 = vadd.f32 0.0, %v1397
      %v1399 = vpop.f32.mrf.mxu0
      %1400 = vmatprep.mubr.f32.mxu0 0.0
      %1401 = vmatmul.mubr.f32.gmra.mxu0 %v1214
      %v1402 = vpop.f32.mrf.mxu0
      %v1403 = vadd.f32 0.0, %v1402
      %v1404 = vpop.f32.mrf.mxu0
      %1405 = vmatprep.mubr.f32.mxu0 0.0
      %1406 = vmatmul.mubr.f32.gmra.mxu0 %v1217
      %v1407 = vpop.f32.mrf.mxu0
      %v1408 = vadd.f32 0.0, %v1407
      %v1409 = vpop.f32.mrf.mxu0
      %1410 = vmatprep.mubr.f32.mxu0 0.0
      %1411 = vmatmul.mubr.f32.gmra.mxu0 %v1220
      %v1412 = vpop.f32.mrf.mxu0
      %v1413 = vadd.f32 0.0, %v1412
      %v1414 = vpop.f32.mrf.mxu0
      %1415 = vmatprep.mubr.f32.mxu0 0.0
      %1416 = vmatmul.mubr.f32.gmra.mxu0 %v1223
      %v1417 = vpop.f32.mrf.mxu0
      %v1418 = vadd.f32 0.0, %v1417
      %v1419 = vpop.f32.mrf.mxu0
      %1420 = vmatprep.mubr.f32.mxu0 0.0
      %1421 = vmatmul.mubr.f32.gmra.mxu0 %v1226
      %v1422 = vpop.f32.mrf.mxu0
      %v1423 = vadd.f32 0.0, %v1422
      %v1424 = vpop.f32.mrf.mxu0
      %1425 = vmatprep.mubr.f32.mxu0 0.0
      %1426 = vmatmul.mubr.f32.gmra.mxu0 %v1229
      %v1427 = vpop.f32.mrf.mxu0
      %v1428 = vadd.f32 0.0, %v1427
      %v1429 = vpop.f32.mrf.mxu0
      %1430 = vmatprep.mubr.f32.mxu0 0.0
      %1431 = vmatmul.mubr.f32.gmra.mxu0 %v1232
      %v1432 = vpop.f32.mrf.mxu0
      %v1433 = vadd.f32 0.0, %v1432
      %v1434 = vpop.f32.mrf.mxu0
      %1435 = vmatprep.mubr.f32.mxu0 0.0
      %1436 = vmatmul.mubr.f32.gmra.mxu0 %v1235
      %v1437 = vpop.f32.mrf.mxu0
      %v1438 = vadd.f32 0.0, %v1437
      %v1439 = vpop.f32.mrf.mxu0
      %1440 = vmatprep.mubr.f32.mxu0 0.0
      %1441 = vmatmul.mubr.f32.gmra.mxu0 %v1238
      %v1442 = vpop.f32.mrf.mxu0
      %v1443 = vadd.f32 0.0, %v1442
      %v1444 = vpop.f32.mrf.mxu0
      %1445 = vmatprep.mubr.f32.mxu0 0.0
      %1446 = vmatmul.mubr.f32.gmra.mxu0 %v1241
      %v1447 = vpop.f32.mrf.mxu0
      %v1448 = vadd.f32 0.0, %v1447
      %v1449 = vpop.f32.mrf.mxu0
      %1450 = vmatprep.mubr.f32.mxu0 0.0
      %1451 = vmatmul.mubr.f32.gmra.mxu0 %v1244
      %v1452 = vpop.f32.mrf.mxu0
      %v1453 = vadd.f32 0.0, %v1452
      %v1454 = vpop.f32.mrf.mxu0
      %1455 = vmatprep.mubr.f32.mxu0 0.0
      %1456 = vmatmul.mubr.f32.gmra.mxu0 %v1247
      %v1457 = vpop.f32.mrf.mxu0
      %v1458 = vadd.f32 0.0, %v1457
      %v1459 = vpop.f32.mrf.mxu0
      %1460 = vmatprep.mubr.f32.mxu0 0.0
      %1461 = vmatmul.mubr.f32.gmra.mxu0 %v1250
      %v1462 = vpop.f32.mrf.mxu0
      %v1463 = vadd.f32 0.0, %v1462
      %v1464 = vpop.f32.mrf.mxu0
      %1465 = vmatprep.mubr.f32.mxu0 0.0
      %1466 = vmatmul.mubr.f32.gmra.mxu0 %v1253
      %v1467 = vpop.f32.mrf.mxu0
      %v1468 = vadd.f32 0.0, %v1467
      %v1469 = vpop.f32.mrf.mxu0
      %1470 = vmatprep.mubr.f32.mxu0 0.0
      %1471 = vmatmul.mubr.f32.gmra.mxu0 %v1256
      %v1472 = vpop.f32.mrf.mxu0
      %v1473 = vadd.f32 0.0, %v1472
      %v1474 = vpop.f32.mrf.mxu0
      %1475 = vmatprep.mubr.f32.mxu0 0.0
      %1476 = vmatmul.mubr.f32.gmra.mxu0 %v1259
      %v1477 = vpop.f32.mrf.mxu0
      %v1478 = vadd.f32 0.0, %v1477
      %v1479 = vpop.f32.mrf.mxu0
      %1480 = vmatprep.mubr.f32.mxu0 0.0
      %1481 = vmatmul.mubr.f32.gmra.mxu0 %v1262
      %v1482 = vpop.f32.mrf.mxu0
      %v1483 = vadd.f32 0.0, %v1482
      %v1484 = vpop.f32.mrf.mxu0
      %1485 = vmatprep.mubr.f32.mxu0 0.0
      %1486 = vmatmul.mubr.f32.gmra.mxu0 %v1265
      %v1487 = vpop.f32.mrf.mxu0
      %v1488 = vadd.f32 0.0, %v1487
      %v1489 = vpop.f32.mrf.mxu0
      %1490 = vmatprep.mubr.f32.mxu0 0.0
      %1491 = vmatmul.mubr.f32.gmra.mxu0 %v1268
      %v1492 = vpop.f32.mrf.mxu0
      %v1493 = vadd.f32 0.0, %v1492
      %v1494 = vpop.f32.mrf.mxu0
      %1495 = vmatprep.mubr.f32.mxu0 0.0
      %1496 = vmatmul.mubr.f32.gmra.mxu0 %v1271
      %v1497 = vpop.f32.mrf.mxu0
      %v1498 = vadd.f32 0.0, %v1497
      %v1499 = vpop.f32.mrf.mxu0
      %1500 = vdwg.mxu0
      %v1501 = vld [vmem:[#allocation2] sm:$0xff]
      %v1502 = vld [vmem:[#allocation2 + $0x8] sm:$0xff]
      %v1503 = vld [vmem:[#allocation2 + $0x10] sm:$0xff]
      %v1504 = vld [vmem:[#allocation2 + $0x18] sm:$0xff]
      %v1505 = vld [vmem:[#allocation2 + $0x20] sm:$0xff]
      %v1506 = vld [vmem:[#allocation2 + $0x28] sm:$0xff]
      %v1507 = vld [vmem:[#allocation2 + $0x30] sm:$0xff]
      %v1508 = vld [vmem:[#allocation2 + $0x38] sm:$0xff]
      %v1509 = vld [vmem:[#allocation2 + $0x40] sm:$0xff]
      %v1510 = vld [vmem:[#allocation2 + $0x48] sm:$0xff]
      %v1511 = vld [vmem:[#allocation2 + $0x50] sm:$0xff]
      %v1512 = vld [vmem:[#allocation2 + $0x58] sm:$0xff]
      %v1513 = vld [vmem:[#allocation2 + $0x60] sm:$0xff]
      %v1514 = vld [vmem:[#allocation2 + $0x68] sm:$0xff]
      %v1515 = vld [vmem:[#allocation2 + $0x70] sm:$0xff]
      %v1516 = vld [vmem:[#allocation2 + $0x78] sm:$0xff]
      %v1517 = vld [vmem:[#allocation2 + $0x80] sm:$0xff]
      %v1518 = vld [vmem:[#allocation2 + $0x88] sm:$0xff]
      %v1519 = vld [vmem:[#allocation2 + $0x90] sm:$0xff]
      %v1520 = vld [vmem:[#allocation2 + $0x98] sm:$0xff]
      %v1521 = vld [vmem:[#allocation2 + $0xa0] sm:$0xff]
      %v1522 = vld [vmem:[#allocation2 + $0xa8] sm:$0xff]
      %v1523 = vld [vmem:[#allocation2 + $0xb0] sm:$0xff]
      %v1524 = vld [vmem:[#allocation2 + $0xb8] sm:$0xff]
      %v1525 = vld [vmem:[#allocation2 + $0xc0] sm:$0xff]
      %v1526 = vld [vmem:[#allocation2 + $0xc8] sm:$0xff]
      %v1527 = vld [vmem:[#allocation2 + $0xd0] sm:$0xff]
      %v1528 = vld [vmem:[#allocation2 + $0xd8] sm:$0xff]
      %v1529 = vld [vmem:[#allocation2 + $0xe0] sm:$0xff]
      %v1530 = vld [vmem:[#allocation2 + $0xe8] sm:$0xff]
      %v1531 = vld [vmem:[#allocation2 + $0xf0] sm:$0xff]
      %v1532 = vld [vmem:[#allocation2 + $0xf8] sm:$0xff]
      %v1533 = vadd.f32 %v1501, %v1343
      %v1534 = vadd.f32 %v1502, %v1348
      %v1535 = vadd.f32 %v1503, %v1353
      %v1536 = vadd.f32 %v1504, %v1358
      %v1537 = vadd.f32 %v1505, %v1363
      %v1538 = vadd.f32 %v1506, %v1368
      %v1539 = vadd.f32 %v1507, %v1373
      %v1540 = vadd.f32 %v1508, %v1378
      %v1541 = vadd.f32 %v1509, %v1383
      %v1542 = vadd.f32 %v1510, %v1388
      %v1543 = vadd.f32 %v1511, %v1393
      %v1544 = vadd.f32 %v1512, %v1398
      %v1545 = vadd.f32 %v1513, %v1403
      %v1546 = vadd.f32 %v1514, %v1408
      %v1547 = vadd.f32 %v1515, %v1413
      %v1548 = vadd.f32 %v1516, %v1418
      %v1549 = vadd.f32 %v1517, %v1423
      %v1550 = vadd.f32 %v1518, %v1428
      %v1551 = vadd.f32 %v1519, %v1433
      %v1552 = vadd.f32 %v1520, %v1438
      %v1553 = vadd.f32 %v1521, %v1443
      %v1554 = vadd.f32 %v1522, %v1448
      %v1555 = vadd.f32 %v1523, %v1453
      %v1556 = vadd.f32 %v1524, %v1458
      %v1557 = vadd.f32 %v1525, %v1463
      %v1558 = vadd.f32 %v1526, %v1468
      %v1559 = vadd.f32 %v1527, %v1473
      %v1560 = vadd.f32 %v1528, %v1478
      %v1561 = vadd.f32 %v1529, %v1483
      %v1562 = vadd.f32 %v1530, %v1488
      %v1563 = vadd.f32 %v1531, %v1493
      %v1564 = vadd.f32 %v1532, %v1498
      %1565 = vst.msk [vmem:[#allocation2] sm:$0xff] %vm654, %v1533
      %1566 = vst.msk [vmem:[#allocation2 + $0x8] sm:$0xff] %vm654, %v1534
      %1567 = vst.msk [vmem:[#allocation2 + $0x10] sm:$0xff] %vm654, %v1535
      %1568 = vst.msk [vmem:[#allocation2 + $0x18] sm:$0xff] %vm654, %v1536
      %1569 = vst.msk [vmem:[#allocation2 + $0x20] sm:$0xff] %vm654, %v1537
      %1570 = vst.msk [vmem:[#allocation2 + $0x28] sm:$0xff] %vm654, %v1538
      %1571 = vst.msk [vmem:[#allocation2 + $0x30] sm:$0xff] %vm654, %v1539
      %1572 = vst.msk [vmem:[#allocation2 + $0x38] sm:$0xff] %vm654, %v1540
      %1573 = vst.msk [vmem:[#allocation2 + $0x40] sm:$0xff] %vm654, %v1541
      %1574 = vst.msk [vmem:[#allocation2 + $0x48] sm:$0xff] %vm654, %v1542
      %1575 = vst.msk [vmem:[#allocation2 + $0x50] sm:$0xff] %vm654, %v1543
      %1576 = vst.msk [vmem:[#allocation2 + $0x58] sm:$0xff] %vm654, %v1544
      %1577 = vst.msk [vmem:[#allocation2 + $0x60] sm:$0xff] %vm654, %v1545
      %1578 = vst.msk [vmem:[#allocation2 + $0x68] sm:$0xff] %vm654, %v1546
      %1579 = vst.msk [vmem:[#allocation2 + $0x70] sm:$0xff] %vm654, %v1547
      %1580 = vst.msk [vmem:[#allocation2 + $0x78] sm:$0xff] %vm654, %v1548
      %1581 = vst.msk [vmem:[#allocation2 + $0x80] sm:$0xff] %vm654, %v1549
      %1582 = vst.msk [vmem:[#allocation2 + $0x88] sm:$0xff] %vm654, %v1550
      %1583 = vst.msk [vmem:[#allocation2 + $0x90] sm:$0xff] %vm654, %v1551
      %1584 = vst.msk [vmem:[#allocation2 + $0x98] sm:$0xff] %vm654, %v1552
      %1585 = vst.msk [vmem:[#allocation2 + $0xa0] sm:$0xff] %vm654, %v1553
      %1586 = vst.msk [vmem:[#allocation2 + $0xa8] sm:$0xff] %vm654, %v1554
      %1587 = vst.msk [vmem:[#allocation2 + $0xb0] sm:$0xff] %vm654, %v1555
      %1588 = vst.msk [vmem:[#allocation2 + $0xb8] sm:$0xff] %vm654, %v1556
      %1589 = vst.msk [vmem:[#allocation2 + $0xc0] sm:$0xff] %vm654, %v1557
      %1590 = vst.msk [vmem:[#allocation2 + $0xc8] sm:$0xff] %vm654, %v1558
      %1591 = vst.msk [vmem:[#allocation2 + $0xd0] sm:$0xff] %vm654, %v1559
      %1592 = vst.msk [vmem:[#allocation2 + $0xd8] sm:$0xff] %vm654, %v1560
      %1593 = vst.msk [vmem:[#allocation2 + $0xe0] sm:$0xff] %vm654, %v1561
      %1594 = vst.msk [vmem:[#allocation2 + $0xe8] sm:$0xff] %vm654, %v1562
      %1595 = vst.msk [vmem:[#allocation2 + $0xf0] sm:$0xff] %vm654, %v1563
      %1596 = vst.msk [vmem:[#allocation2 + $0xf8] sm:$0xff] %vm654, %v1564
      %v1597 = vld [vmem:[#allocation2] sm:$0xff]
      %v1598 = vld [vmem:[#allocation2 + $0x8] sm:$0xff]
      %v1599 = vld [vmem:[#allocation2 + $0x10] sm:$0xff]
      %v1600 = vld [vmem:[#allocation2 + $0x18] sm:$0xff]
      %v1601 = vld [vmem:[#allocation2 + $0x20] sm:$0xff]
      %v1602 = vld [vmem:[#allocation2 + $0x28] sm:$0xff]
      %v1603 = vld [vmem:[#allocation2 + $0x30] sm:$0xff]
      %v1604 = vld [vmem:[#allocation2 + $0x38] sm:$0xff]
      %v1605 = vld [vmem:[#allocation2 + $0x40] sm:$0xff]
      %v1606 = vld [vmem:[#allocation2 + $0x48] sm:$0xff]
      %v1607 = vld [vmem:[#allocation2 + $0x50] sm:$0xff]
      %v1608 = vld [vmem:[#allocation2 + $0x58] sm:$0xff]
      %v1609 = vld [vmem:[#allocation2 + $0x60] sm:$0xff]
      %v1610 = vld [vmem:[#allocation2 + $0x68] sm:$0xff]
      %v1611 = vld [vmem:[#allocation2 + $0x70] sm:$0xff]
      %v1612 = vld [vmem:[#allocation2 + $0x78] sm:$0xff]
      %v1613 = vld [vmem:[#allocation2 + $0x80] sm:$0xff]
      %v1614 = vld [vmem:[#allocation2 + $0x88] sm:$0xff]
      %v1615 = vld [vmem:[#allocation2 + $0x90] sm:$0xff]
      %v1616 = vld [vmem:[#allocation2 + $0x98] sm:$0xff]
      %v1617 = vld [vmem:[#allocation2 + $0xa0] sm:$0xff]
      %v1618 = vld [vmem:[#allocation2 + $0xa8] sm:$0xff]
      %v1619 = vld [vmem:[#allocation2 + $0xb0] sm:$0xff]
      %v1620 = vld [vmem:[#allocation2 + $0xb8] sm:$0xff]
      %v1621 = vld [vmem:[#allocation2 + $0xc0] sm:$0xff]
      %v1622 = vld [vmem:[#allocation2 + $0xc8] sm:$0xff]
      %v1623 = vld [vmem:[#allocation2 + $0xd0] sm:$0xff]
      %v1624 = vld [vmem:[#allocation2 + $0xd8] sm:$0xff]
      %v1625 = vld [vmem:[#allocation2 + $0xe0] sm:$0xff]
      %v1626 = vld [vmem:[#allocation2 + $0xe8] sm:$0xff]
      %v1627 = vld [vmem:[#allocation2 + $0xf0] sm:$0xff]
      %v1628 = vld [vmem:[#allocation2 + $0xf8] sm:$0xff]
      %v1629 = vld [vmem:[%s278] sm:$0x1]
      %v1631 = vlaneseq
      %v1632 = vshrl.u32 %v1631, 7
      %v1633 = vsub.s32 0, %v1632
      %v1634 = vrot.slane %v1629, %v1633
      %v1636 = vmul.f32 %v1597, %v1634
      %v1637 = vmul.f32 %v1598, %v1634
      %v1638 = vmul.f32 %v1599, %v1634
      %v1639 = vmul.f32 %v1600, %v1634
      %v1640 = vmul.f32 %v1601, %v1634
      %v1641 = vmul.f32 %v1602, %v1634
      %v1642 = vmul.f32 %v1603, %v1634
      %v1643 = vmul.f32 %v1604, %v1634
      %v1644 = vmul.f32 %v1605, %v1634
      %v1645 = vmul.f32 %v1606, %v1634
      %v1646 = vmul.f32 %v1607, %v1634
      %v1647 = vmul.f32 %v1608, %v1634
      %v1648 = vmul.f32 %v1609, %v1634
      %v1649 = vmul.f32 %v1610, %v1634
      %v1650 = vmul.f32 %v1611, %v1634
      %v1651 = vmul.f32 %v1612, %v1634
      %v1652 = vmul.f32 %v1613, %v1634
      %v1653 = vmul.f32 %v1614, %v1634
      %v1654 = vmul.f32 %v1615, %v1634
      %v1655 = vmul.f32 %v1616, %v1634
      %v1656 = vmul.f32 %v1617, %v1634
      %v1657 = vmul.f32 %v1618, %v1634
      %v1658 = vmul.f32 %v1619, %v1634
      %v1659 = vmul.f32 %v1620, %v1634
      %v1660 = vmul.f32 %v1621, %v1634
      %v1661 = vmul.f32 %v1622, %v1634
      %v1662 = vmul.f32 %v1623, %v1634
      %v1663 = vmul.f32 %v1624, %v1634
      %v1664 = vmul.f32 %v1625, %v1634
      %v1665 = vmul.f32 %v1626, %v1634
      %v1666 = vmul.f32 %v1627, %v1634
      %v1667 = vmul.f32 %v1628, %v1634
      %v1668 = vld [vmem:[%s281] sm:$0x1]
      %v1670 = vlaneseq
      %v1671 = vshrl.u32 %v1670, 7
      %v1672 = vsub.s32 0, %v1671
      %v1673 = vrot.slane %v1668, %v1672
      %v1675 = vadd.f32 %v1636, %v1673
      %v1676 = vadd.f32 %v1637, %v1673
      %v1677 = vadd.f32 %v1638, %v1673
      %v1678 = vadd.f32 %v1639, %v1673
      %v1679 = vadd.f32 %v1640, %v1673
      %v1680 = vadd.f32 %v1641, %v1673
      %v1681 = vadd.f32 %v1642, %v1673
      %v1682 = vadd.f32 %v1643, %v1673
      %v1683 = vadd.f32 %v1644, %v1673
      %v1684 = vadd.f32 %v1645, %v1673
      %v1685 = vadd.f32 %v1646, %v1673
      %v1686 = vadd.f32 %v1647, %v1673
      %v1687 = vadd.f32 %v1648, %v1673
      %v1688 = vadd.f32 %v1649, %v1673
      %v1689 = vadd.f32 %v1650, %v1673
      %v1690 = vadd.f32 %v1651, %v1673
      %v1691 = vadd.f32 %v1652, %v1673
      %v1692 = vadd.f32 %v1653, %v1673
      %v1693 = vadd.f32 %v1654, %v1673
      %v1694 = vadd.f32 %v1655, %v1673
      %v1695 = vadd.f32 %v1656, %v1673
      %v1696 = vadd.f32 %v1657, %v1673
      %v1697 = vadd.f32 %v1658, %v1673
      %v1698 = vadd.f32 %v1659, %v1673
      %v1699 = vadd.f32 %v1660, %v1673
      %v1700 = vadd.f32 %v1661, %v1673
      %v1701 = vadd.f32 %v1662, %v1673
      %v1702 = vadd.f32 %v1663, %v1673
      %v1703 = vadd.f32 %v1664, %v1673
      %v1704 = vadd.f32 %v1665, %v1673
      %v1705 = vadd.f32 %v1666, %v1673
      %v1706 = vadd.f32 %v1667, %v1673
      %v1707 = vmax.f32 %v1675, 0.0
      %v1708 = vmax.f32 %v1676, 0.0
      %v1709 = vmax.f32 %v1677, 0.0
      %v1710 = vmax.f32 %v1678, 0.0
      %v1711 = vmax.f32 %v1679, 0.0
      %v1712 = vmax.f32 %v1680, 0.0
      %v1713 = vmax.f32 %v1681, 0.0
      %v1714 = vmax.f32 %v1682, 0.0
      %v1715 = vmax.f32 %v1683, 0.0
      %v1716 = vmax.f32 %v1684, 0.0
      %v1717 = vmax.f32 %v1685, 0.0
      %v1718 = vmax.f32 %v1686, 0.0
      %v1719 = vmax.f32 %v1687, 0.0
      %v1720 = vmax.f32 %v1688, 0.0
      %v1721 = vmax.f32 %v1689, 0.0
      %v1722 = vmax.f32 %v1690, 0.0
      %v1723 = vmax.f32 %v1691, 0.0
      %v1724 = vmax.f32 %v1692, 0.0
      %v1725 = vmax.f32 %v1693, 0.0
      %v1726 = vmax.f32 %v1694, 0.0
      %v1727 = vmax.f32 %v1695, 0.0
      %v1728 = vmax.f32 %v1696, 0.0
      %v1729 = vmax.f32 %v1697, 0.0
      %v1730 = vmax.f32 %v1698, 0.0
      %v1731 = vmax.f32 %v1699, 0.0
      %v1732 = vmax.f32 %v1700, 0.0
      %v1733 = vmax.f32 %v1701, 0.0
      %v1734 = vmax.f32 %v1702, 0.0
      %v1735 = vmax.f32 %v1703, 0.0
      %v1736 = vmax.f32 %v1704, 0.0
      %v1737 = vmax.f32 %v1705, 0.0
      %v1738 = vmax.f32 %v1706, 0.0
      %1739 = vst.msk [vmem:[%s293] sm:$0xff] %vm654, %v1707
      %1740 = vst.msk [vmem:[%s293 + $0x8] sm:$0xff] %vm654, %v1708
      %1741 = vst.msk [vmem:[%s293 + $0x10] sm:$0xff] %vm654, %v1709
      %1742 = vst.msk [vmem:[%s293 + $0x18] sm:$0xff] %vm654, %v1710
      %1743 = vst.msk [vmem:[%s293 + $0x20] sm:$0xff] %vm654, %v1711
      %1744 = vst.msk [vmem:[%s293 + $0x28] sm:$0xff] %vm654, %v1712
      %1745 = vst.msk [vmem:[%s293 + $0x30] sm:$0xff] %vm654, %v1713
      %1746 = vst.msk [vmem:[%s293 + $0x38] sm:$0xff] %vm654, %v1714
      %1747 = vst.msk [vmem:[%s293 + $0x40] sm:$0xff] %vm654, %v1715
      %1748 = vst.msk [vmem:[%s293 + $0x48] sm:$0xff] %vm654, %v1716
      %1749 = vst.msk [vmem:[%s293 + $0x50] sm:$0xff] %vm654, %v1717
      %1750 = vst.msk [vmem:[%s293 + $0x58] sm:$0xff] %vm654, %v1718
      %1751 = vst.msk [vmem:[%s293 + $0x60] sm:$0xff] %vm654, %v1719
      %1752 = vst.msk [vmem:[%s293 + $0x68] sm:$0xff] %vm654, %v1720
      %1753 = vst.msk [vmem:[%s293 + $0x70] sm:$0xff] %vm654, %v1721
      %1754 = vst.msk [vmem:[%s293 + $0x78] sm:$0xff] %vm654, %v1722
      %1755 = vst.msk [vmem:[%s293 + $0x80] sm:$0xff] %vm654, %v1723
      %1756 = vst.msk [vmem:[%s293 + $0x88] sm:$0xff] %vm654, %v1724
      %1757 = vst.msk [vmem:[%s293 + $0x90] sm:$0xff] %vm654, %v1725
      %1758 = vst.msk [vmem:[%s293 + $0x98] sm:$0xff] %vm654, %v1726
      %1759 = vst.msk [vmem:[%s293 + $0xa0] sm:$0xff] %vm654, %v1727
      %1760 = vst.msk [vmem:[%s293 + $0xa8] sm:$0xff] %vm654, %v1728
      %1761 = vst.msk [vmem:[%s293 + $0xb0] sm:$0xff] %vm654, %v1729
      %1762 = vst.msk [vmem:[%s293 + $0xb8] sm:$0xff] %vm654, %v1730
      %1763 = vst.msk [vmem:[%s293 + $0xc0] sm:$0xff] %vm654, %v1731
      %1764 = vst.msk [vmem:[%s293 + $0xc8] sm:$0xff] %vm654, %v1732
      %1765 = vst.msk [vmem:[%s293 + $0xd0] sm:$0xff] %vm654, %v1733
      %1766 = vst.msk [vmem:[%s293 + $0xd8] sm:$0xff] %vm654, %v1734
      %1767 = vst.msk [vmem:[%s293 + $0xe0] sm:$0xff] %vm654, %v1735
      %1768 = vst.msk [vmem:[%s293 + $0xe8] sm:$0xff] %vm654, %v1736
      %1769 = vst.msk [vmem:[%s293 + $0xf0] sm:$0xff] %vm654, %v1737
      %1770 = vst.msk [vmem:[%s293 + $0xf8] sm:$0xff] %vm654, %v1738
      %p1771 = scmp.lt.s32.totalorder %s21, 1
      %s1772 = scalar_select %p1771, %s21, 1
      %p1773 = scmp.lt.s32.totalorder %s22, 0
      %s1774 = scalar_select %p1773, %s22, 0
      %p1775 = scmp.lt.s32.totalorder %s20, 0
      %s1776 = scalar_select %p1775, %s20, 0
      %s1777 = smul.addr %s1774, 32
      %s1778 = sadd.s32 %s1776, %s1777
      %s1779 = smul.addr %s1772, 32
      %s1780 = sadd.s32 %s1778, %s1779
      %s1781 = smul.addr %s1780, 8
      %s1782 = scalar_lea.vmem %s4, %s1781
      // Predicated region
      $region37: #{conv_norm_act.1} parent=35 // pred_check
        %p1783 = pneg %p162
      $region38: #{conv_norm_act.1} parent=35 // pred_check_branch
        %1785 = sbr.rel (%p1783) target = $region40
      $region39: #{conv_norm_act.1} parent=35 // pred_region
        _
      $region40: #{conv_norm_act.1} parent=35 // pred_fallthru
        _
    $region36: #{conv_norm_act.1} parent=5 // pred_fallthru
      _
    %p1786 = scmp.le.s32.totalorder 2, %s10
    // Predicated region
    $region41: #{conv_norm_act.1} parent=5 // pred_check
      %p1787 = pneg %p1786
    $region42: #{conv_norm_act.1} parent=5 // pred_check_branch
      %1789 = sbr.rel (%p1787) target = $region44
    $region43: #{conv_norm_act.1} parent=5 // pred_region
      %s1790 = ssub.s32 %s10, 2
      // Predicated region
      $region45: #{conv_norm_act.1} parent=43 // pred_check
        %p1791 = pneg %p168
      $region46: #{conv_norm_act.1} parent=43 // pred_check_branch
        %1793 = sbr.rel (%p1791) target = $region48
      $region47: #{conv_norm_act.1} parent=43 // pred_region
        %p1794 = scmp.lt.s32.totalorder %s24, 1
        %s1795 = scalar_select %p1794, %s24, 1
        %p1796 = scmp.lt.s32.totalorder %s25, 0
        %s1797 = scalar_select %p1796, %s25, 0
        %p1798 = scmp.lt.s32.totalorder %s23, 0
        %s1799 = scalar_select %p1798, %s23, 0
        %s1800 = smul.addr %s1797, 32
        %s1801 = sadd.s32 %s1799, %s1800
        %s1802 = smul.addr %s1795, 32
        %s1803 = sadd.s32 %s1801, %s1802
        %s1804 = smul.addr %s1803, 8
        %s1805 = scalar_lea.vmem %s4, %s1804
      $region48: #{conv_norm_act.1} parent=43 // pred_fallthru
        _
    $region44: #{conv_norm_act.1} parent=5 // pred_fallthru
      _
  $region6: #{conv_norm_act.1} parent=0 // loop_footer
    %s14 = sadd.s32 1, %s10
  $region7: #{conv_norm_act.1} parent=0 // loop_footer_branch
    %9 = sbr.rel target = $region3
  $region8: #{conv_norm_act.1} parent=0 // loop_exit
    _

</llo_original>
